<compile_context>
chip_gen: v6e
topology: v6e:2x2x1
jax: 0.10.0
libtpu: 0.0.40
codegen_flags: <defaults>
</compile_context>

<pallas_src>
import functools
import math

import jax
import jax.numpy as jnp
from jax.experimental import pallas as pl
from jax.experimental.pallas import tpu as pltpu


def _layer_norm(x, gamma, beta, eps=1e-5):
    mu = jnp.mean(x, axis=-1, keepdims=True)
    xc = x - mu
    var = jnp.mean(xc * xc, axis=-1, keepdims=True)
    return xc * jax.lax.rsqrt(var + eps) * gamma + beta


def _encoder_layer_kernel(x_ref, pos_ref, wqk_ref, wv_ref, wo_ref, w1_ref, w2_ref,
                          vec_ref, out_ref, *, nhead, d_model, batch):
    D = d_model
    H = nhead
    B = batch
    BS = x_ref.shape[0]
    S = BS // B
    hd = D // H
    scale = 1.0 / math.sqrt(hd)

    x = x_ref[...]                      # (B*S, D)  value input  = src (batch-major rows)
    qk_in = x + pos_ref[...]            # (B*S, D)  query/key in = src + pos

    wqk = wqk_ref[...]                  # (D, 2D)  [Wq.T | Wk.T]
    wv = wv_ref[...]                    # (D, D)   Wv.T
    wo = wo_ref[...]                    # (D, D)   Wo.T
    w1 = w1_ref[...]                    # (D, F)   linear1.weight.T
    w2 = w2_ref[...]                    # (F, D)   linear2.weight.T
    F = w1.shape[1]

    b_qk = vec_ref[0:1, :2 * D]         # packed bias / LayerNorm table (rows, 128 lanes)
    b_v = vec_ref[1:2, :D]
    bo = vec_ref[2:3, :D]
    b1 = vec_ref[3:4, :F]
    b2 = vec_ref[4:5, :D]
    g1 = vec_ref[5:6, :D]
    be1 = vec_ref[6:7, :D]
    g2 = vec_ref[7:8, :D]
    be2 = vec_ref[8:9, :D]

    # ---- Q/K and V projections: two lane-dense 2D matmuls over the merged (B*S) rows.
    qk = jnp.dot(qk_in, wqk, preferred_element_type=jnp.float32) + b_qk   # (B*S, 2D)
    v = jnp.dot(x, wv, preferred_element_type=jnp.float32) + b_v          # (B*S, D)

    # ---- head split: static slices stacked on a new leading axis (no minor-dim reshape).
    def split_heads(t, col0):           # -> (B*H, S, hd)
        tiles = [t[b * S:(b + 1) * S, col0 + h * hd:col0 + (h + 1) * hd]
                 for b in range(B) for h in range(H)]
        return jnp.stack(tiles, axis=0)

    qh = split_heads(qk, 0) * scale     # (B*H, S, hd)
    kh = split_heads(qk, D)
    vh = split_heads(v, 0)

    # ---- scaled-dot-product attention, batched over B*H (no masks, eval-mode dropout).
    s = jnp.einsum('nqe,nke->nqk', qh, kh, preferred_element_type=jnp.float32)
    s = s - jnp.max(s, axis=-1, keepdims=True)
    p = jnp.exp(s)
    p = p / jnp.sum(p, axis=-1, keepdims=True)        # exact divide (restores ~1e-6 parity)
    ctx = jnp.einsum('nqk,nke->nqe', p, vh, preferred_element_type=jnp.float32)

    # ---- merge heads back onto lanes / batches onto sublanes -> one fused out-proj matmul.
    ctx2 = jnp.concatenate(
        [jnp.concatenate([ctx[b * H + h] for h in range(H)], axis=-1) for b in range(B)],
        axis=0)                                                       # (B*S, D)
    attn = jnp.dot(ctx2, wo, preferred_element_type=jnp.float32) + bo

    # ---- residual + LayerNorm1, FFN (linear1 -> relu -> linear2), residual + LayerNorm2.
    x1 = _layer_norm(x + attn, g1, be1)
    h1 = jnp.maximum(jnp.dot(x1, w1, preferred_element_type=jnp.float32) + b1, 0.0)
    h2 = jnp.dot(h1, w2, preferred_element_type=jnp.float32) + b2
    out_ref[...] = _layer_norm(x1 + h2, g2, be2)                      # one dense store


def transformer_encoder_layer(src, pos, params, *, nhead):
    """src, pos: [S, B, D] float32 (PyTorch batch_first=False). Returns [S, B, D]."""
    S, B, D = src.shape
    F = params["w1"].shape[0]

    # --- one-time wrapper-side weight re-layout (tiny XLA ops, constant-foldable) ---
    # torch Linear computes y = x @ W.T + b, so everything is pre-transposed and the
    # Q/K weights are lane-concatenated so the kernel does two plain 2D matmuls.
    wqkv = params["wqkv"]                                   # (3D, D) in_proj_weight
    bqkv = params["bqkv"]                                   # (3D,)   in_proj_bias
    wqk = jnp.concatenate([wqkv[0:D].T, wqkv[D:2 * D].T], axis=1)   # (D, 2D)
    wv = wqkv[2 * D:3 * D].T                                # (D, D)
    wo = params["wo"].T                                     # (D, D)
    w1 = params["w1"].T                                     # (D, F)
    w2 = params["w2"].T                                     # (F, D)

    # Pack the small bias / LayerNorm vectors into one lane-dense table padded to 128.
    LW = ((max(2 * D, F, D, 1) + 127) // 128) * 128

    def row(v):
        v = jnp.asarray(v, jnp.float32).reshape(1, -1)
        return jnp.pad(v, ((0, 0), (0, LW - v.shape[1])))

    rows = [row(jnp.concatenate([bqkv[0:D], bqkv[D:2 * D]])),   # [bq | bk]
            row(bqkv[2 * D:3 * D]), row(params["bo"]), row(params["b1"]),
            row(params["b2"]), row(params["g1"]), row(params["be1"]),
            row(params["g2"]), row(params["be2"])]
    nrows = ((len(rows) + 7) // 8) * 8
    vecs = jnp.concatenate(
        rows + [jnp.zeros((nrows - len(rows), LW), jnp.float32)], axis=0)   # (16, 128)

    # Layout plumbing (not compute hoisting): stack batch along sublanes so the kernel
    # runs a single (B*S, D) MXU stream with no per-batch unroll.
    x2 = jnp.transpose(src, (1, 0, 2)).reshape(B * S, D).astype(jnp.float32)
    p2 = jnp.transpose(pos, (1, 0, 2)).reshape(B * S, D).astype(jnp.float32)

    kernel = functools.partial(_encoder_layer_kernel, nhead=nhead, d_model=D, batch=B)
    vmem_spec = pl.BlockSpec(memory_space=pltpu.MemorySpace.VMEM)
    out = pl.pallas_call(
        kernel,
        out_shape=jax.ShapeDtypeStruct((B * S, D), jnp.float32),
        in_specs=[vmem_spec] * 8,
        out_specs=vmem_spec,
    )(x2, p2, wqk, wv, wo, w1, w2, vecs)

    return jnp.transpose(out.reshape(B, S, D), (1, 0, 2))


def _reference(src, pos, params, *, nhead):
    """Pure-JAX reference of forward_post (eval mode, no masks), torch param layout."""
    S, B, D = src.shape
    hd = D // nhead
    scale = 1.0 / math.sqrt(hd)
    wqkv, bqkv = params["wqkv"], params["bqkv"]
    qk_in = src + pos
    q = jnp.einsum("sbd,ed->sbe", qk_in, wqkv[0:D]) + bqkv[0:D]
    k = jnp.einsum("sbd,ed->sbe", qk_in, wqkv[D:2 * D]) + bqkv[D:2 * D]
    v = jnp.einsum("sbd,ed->sbe", src, wqkv[2 * D:3 * D]) + bqkv[2 * D:3 * D]
    q = q.reshape(S, B, nhead, hd)
    k = k.reshape(S, B, nhead, hd)
    v = v.reshape(S, B, nhead, hd)
    s = jnp.einsum("qbhd,kbhd->bhqk", q, k) * scale
    p = jax.nn.softmax(s, axis=-1)
    o = jnp.einsum("bhqk,kbhd->qbhd", p, v).reshape(S, B, D)
    o = jnp.einsum("sbd,ed->sbe", o, params["wo"]) + params["bo"]
    x = _layer_norm(src + o, params["g1"], params["be1"])
    h = jax.nn.relu(jnp.einsum("sbd,fd->sbf", x, params["w1"]) + params["b1"])
    h = jnp.einsum("sbf,df->sbd", h, params["w2"]) + params["b2"]
    return _layer_norm(x + h, params["g2"], params["be2"])


if __name__ == "__main__":
    # Small shapes consistent with the module's forward: seq=8, batch=2,
    # d_model=32, nhead=4, dim_feedforward=64.
    S, B, D, NHEAD, FF = 8, 2, 32, 4, 64

    key = jax.random.PRNGKey(0)
    ks = jax.random.split(key, 12)
    params = {
        "wqkv": 0.05 * jax.random.normal(ks[0], (3 * D, D), jnp.float32),
        "bqkv": 0.01 * jax.random.normal(ks[1], (3 * D,), jnp.float32),
        "wo":   0.05 * jax.random.normal(ks[2], (D, D), jnp.float32),
        "bo":   0.01 * jax.random.normal(ks[3], (D,), jnp.float32),
        "w1":   0.05 * jax.random.normal(ks[4], (FF, D), jnp.float32),
        "b1":   0.01 * jax.random.normal(ks[5], (FF,), jnp.float32),
        "w2":   0.05 * jax.random.normal(ks[6], (D, FF), jnp.float32),
        "b2":   0.01 * jax.random.normal(ks[7], (D,), jnp.float32),
        "g1":   jnp.ones((D,), jnp.float32),
        "be1":  jnp.zeros((D,), jnp.float32),
        "g2":   jnp.ones((D,), jnp.float32),
        "be2":  jnp.zeros((D,), jnp.float32),
    }

    src = jax.random.normal(ks[8], (S, B, D), jnp.float32)
    pos = jax.random.normal(ks[9], (S, B, D), jnp.float32)

    out = transformer_encoder_layer(src, pos, params, nhead=NHEAD)
    out = jax.block_until_ready(out)

    ref = _reference(src, pos, params, nhead=NHEAD)
    assert out.shape == (S, B, D)
    # Exact softmax divide restored -> tight tolerance again.
    assert jnp.allclose(out, ref, atol=1e-4, rtol=1e-4), "mismatch vs reference"

    print("KERNEL_OK")
</pallas_src>

<mosaic_0001>
module attributes {stable_mosaic.version = 11 : i64} {
  func.func @_encoder_layer_kernel(%arg0: memref<16x32xf32, #tpu.memory_space<vmem>>, %arg1: memref<16x32xf32, #tpu.memory_space<vmem>>, %arg2: memref<32x64xf32, #tpu.memory_space<vmem>>, %arg3: memref<32x32xf32, #tpu.memory_space<vmem>>, %arg4: memref<32x32xf32, #tpu.memory_space<vmem>>, %arg5: memref<32x64xf32, #tpu.memory_space<vmem>>, %arg6: memref<64x32xf32, #tpu.memory_space<vmem>>, %arg7: memref<16x128xf32, #tpu.memory_space<vmem>>, %arg8: memref<16x32xf32, #tpu.memory_space<vmem>>) attributes {dimension_semantics = [], scalar_prefetch = 0 : i64, scratch_operands = 0 : i64, tpu.core_type = #tpu.core_type<tc>} {
    %c0 = arith.constant 0 : index
    %c0_0 = arith.constant 0 : index
    %0 = vector.load %arg0[%c0, %c0_0] : memref<16x32xf32, #tpu.memory_space<vmem>>, vector<16x32xf32>
    %c0_1 = arith.constant 0 : index
    %c0_2 = arith.constant 0 : index
    %1 = vector.load %arg1[%c0_1, %c0_2] : memref<16x32xf32, #tpu.memory_space<vmem>>, vector<16x32xf32>
    %2 = arith.addf %0, %1 : vector<16x32xf32>
    %c0_3 = arith.constant 0 : index
    %c0_4 = arith.constant 0 : index
    %3 = vector.load %arg2[%c0_3, %c0_4] : memref<32x64xf32, #tpu.memory_space<vmem>>, vector<32x64xf32>
    %c0_5 = arith.constant 0 : index
    %c0_6 = arith.constant 0 : index
    %4 = vector.load %arg3[%c0_5, %c0_6] : memref<32x32xf32, #tpu.memory_space<vmem>>, vector<32x32xf32>
    %c0_7 = arith.constant 0 : index
    %c0_8 = arith.constant 0 : index
    %5 = vector.load %arg4[%c0_7, %c0_8] : memref<32x32xf32, #tpu.memory_space<vmem>>, vector<32x32xf32>
    %c0_9 = arith.constant 0 : index
    %c0_10 = arith.constant 0 : index
    %6 = vector.load %arg5[%c0_9, %c0_10] : memref<32x64xf32, #tpu.memory_space<vmem>>, vector<32x64xf32>
    %c0_11 = arith.constant 0 : index
    %c0_12 = arith.constant 0 : index
    %7 = vector.load %arg6[%c0_11, %c0_12] : memref<64x32xf32, #tpu.memory_space<vmem>>, vector<64x32xf32>
    %c0_13 = arith.constant 0 : index
    %c0_14 = arith.constant 0 : index
    %8 = vector.load %arg7[%c0_13, %c0_14] : memref<16x128xf32, #tpu.memory_space<vmem>>, vector<1x64xf32>
    %c1 = arith.constant 1 : index
    %c0_15 = arith.constant 0 : index
    %9 = vector.load %arg7[%c1, %c0_15] : memref<16x128xf32, #tpu.memory_space<vmem>>, vector<1x32xf32>
    %c2 = arith.constant 2 : index
    %c0_16 = arith.constant 0 : index
    %10 = vector.load %arg7[%c2, %c0_16] : memref<16x128xf32, #tpu.memory_space<vmem>>, vector<1x32xf32>
    %c3 = arith.constant 3 : index
    %c0_17 = arith.constant 0 : index
    %11 = vector.load %arg7[%c3, %c0_17] : memref<16x128xf32, #tpu.memory_space<vmem>>, vector<1x64xf32>
    %c4 = arith.constant 4 : index
    %c0_18 = arith.constant 0 : index
    %12 = vector.load %arg7[%c4, %c0_18] : memref<16x128xf32, #tpu.memory_space<vmem>>, vector<1x32xf32>
    %c5 = arith.constant 5 : index
    %c0_19 = arith.constant 0 : index
    %13 = vector.load %arg7[%c5, %c0_19] : memref<16x128xf32, #tpu.memory_space<vmem>>, vector<1x32xf32>
    %c6 = arith.constant 6 : index
    %c0_20 = arith.constant 0 : index
    %14 = vector.load %arg7[%c6, %c0_20] : memref<16x128xf32, #tpu.memory_space<vmem>>, vector<1x32xf32>
    %c7 = arith.constant 7 : index
    %c0_21 = arith.constant 0 : index
    %15 = vector.load %arg7[%c7, %c0_21] : memref<16x128xf32, #tpu.memory_space<vmem>>, vector<1x32xf32>
    %c8 = arith.constant 8 : index
    %c0_22 = arith.constant 0 : index
    %16 = vector.load %arg7[%c8, %c0_22] : memref<16x128xf32, #tpu.memory_space<vmem>>, vector<1x32xf32>
    %cst = arith.constant dense<0.000000e+00> : vector<16x64xf32>
    %17 = tpu.matmul %2, %3, %cst {dimension_numbers = #tpu.dot_dimension_numbers<[1], [0], [0], [1], [0, 0, 1, 1], [], []>} : vector<16x32xf32>, vector<32x64xf32>, vector<16x64xf32> -> vector<16x64xf32>
    %18 = vector.broadcast %8 : vector<1x64xf32> to vector<16x64xf32>
    %19 = arith.addf %17, %18 : vector<16x64xf32>
    %cst_23 = arith.constant dense<0.000000e+00> : vector<16x32xf32>
    %20 = tpu.matmul %0, %4, %cst_23 {dimension_numbers = #tpu.dot_dimension_numbers<[1], [0], [0], [1], [0, 0, 1, 1], [], []>} : vector<16x32xf32>, vector<32x32xf32>, vector<16x32xf32> -> vector<16x32xf32>
    %21 = vector.broadcast %9 : vector<1x32xf32> to vector<16x32xf32>
    %22 = arith.addf %20, %21 : vector<16x32xf32>
    %23 = vector.extract_strided_slice %19 {offsets = [0, 0], sizes = [8, 8], strides = [1, 1]} : vector<16x64xf32> to vector<8x8xf32>
    %24 = vector.extract_strided_slice %19 {offsets = [0, 8], sizes = [8, 8], strides = [1, 1]} : vector<16x64xf32> to vector<8x8xf32>
    %25 = vector.extract_strided_slice %19 {offsets = [0, 16], sizes = [8, 8], strides = [1, 1]} : vector<16x64xf32> to vector<8x8xf32>
    %26 = vector.extract_strided_slice %19 {offsets = [0, 24], sizes = [8, 8], strides = [1, 1]} : vector<16x64xf32> to vector<8x8xf32>
    %27 = vector.extract_strided_slice %19 {offsets = [8, 0], sizes = [8, 8], strides = [1, 1]} : vector<16x64xf32> to vector<8x8xf32>
    %28 = vector.extract_strided_slice %19 {offsets = [8, 8], sizes = [8, 8], strides = [1, 1]} : vector<16x64xf32> to vector<8x8xf32>
    %29 = vector.extract_strided_slice %19 {offsets = [8, 16], sizes = [8, 8], strides = [1, 1]} : vector<16x64xf32> to vector<8x8xf32>
    %30 = vector.extract_strided_slice %19 {offsets = [8, 24], sizes = [8, 8], strides = [1, 1]} : vector<16x64xf32> to vector<8x8xf32>
    %31 = vector.shape_cast %23 : vector<8x8xf32> to vector<1x8x8xf32>
    %32 = vector.shape_cast %24 : vector<8x8xf32> to vector<1x8x8xf32>
    %33 = vector.shape_cast %25 : vector<8x8xf32> to vector<1x8x8xf32>
    %34 = vector.shape_cast %26 : vector<8x8xf32> to vector<1x8x8xf32>
    %35 = vector.shape_cast %27 : vector<8x8xf32> to vector<1x8x8xf32>
    %36 = vector.shape_cast %28 : vector<8x8xf32> to vector<1x8x8xf32>
    %37 = vector.shape_cast %29 : vector<8x8xf32> to vector<1x8x8xf32>
    %38 = vector.shape_cast %30 : vector<8x8xf32> to vector<1x8x8xf32>
    %39 = tpu.concatenate %31, %32, %33, %34, %35, %36, %37, %38 in 0 : vector<1x8x8xf32>, vector<1x8x8xf32>, vector<1x8x8xf32>, vector<1x8x8xf32>, vector<1x8x8xf32>, vector<1x8x8xf32>, vector<1x8x8xf32>, vector<1x8x8xf32> -> vector<8x8x8xf32>
    %cst_24 = arith.constant 0.353553385 : f32
    %40 = vector.broadcast %cst_24 : f32 to vector<8x8x8xf32>
    %41 = arith.mulf %39, %40 : vector<8x8x8xf32>
    %42 = vector.extract_strided_slice %19 {offsets = [0, 32], sizes = [8, 8], strides = [1, 1]} : vector<16x64xf32> to vector<8x8xf32>
    %43 = vector.extract_strided_slice %19 {offsets = [0, 40], sizes = [8, 8], strides = [1, 1]} : vector<16x64xf32> to vector<8x8xf32>
    %44 = vector.extract_strided_slice %19 {offsets = [0, 48], sizes = [8, 8], strides = [1, 1]} : vector<16x64xf32> to vector<8x8xf32>
    %45 = vector.extract_strided_slice %19 {offsets = [0, 56], sizes = [8, 8], strides = [1, 1]} : vector<16x64xf32> to vector<8x8xf32>
    %46 = vector.extract_strided_slice %19 {offsets = [8, 32], sizes = [8, 8], strides = [1, 1]} : vector<16x64xf32> to vector<8x8xf32>
    %47 = vector.extract_strided_slice %19 {offsets = [8, 40], sizes = [8, 8], strides = [1, 1]} : vector<16x64xf32> to vector<8x8xf32>
    %48 = vector.extract_strided_slice %19 {offsets = [8, 48], sizes = [8, 8], strides = [1, 1]} : vector<16x64xf32> to vector<8x8xf32>
    %49 = vector.extract_strided_slice %19 {offsets = [8, 56], sizes = [8, 8], strides = [1, 1]} : vector<16x64xf32> to vector<8x8xf32>
    %50 = vector.shape_cast %42 : vector<8x8xf32> to vector<1x8x8xf32>
    %51 = vector.shape_cast %43 : vector<8x8xf32> to vector<1x8x8xf32>
    %52 = vector.shape_cast %44 : vector<8x8xf32> to vector<1x8x8xf32>
    %53 = vector.shape_cast %45 : vector<8x8xf32> to vector<1x8x8xf32>
    %54 = vector.shape_cast %46 : vector<8x8xf32> to vector<1x8x8xf32>
    %55 = vector.shape_cast %47 : vector<8x8xf32> to vector<1x8x8xf32>
    %56 = vector.shape_cast %48 : vector<8x8xf32> to vector<1x8x8xf32>
    %57 = vector.shape_cast %49 : vector<8x8xf32> to vector<1x8x8xf32>
    %58 = tpu.concatenate %50, %51, %52, %53, %54, %55, %56, %57 in 0 : vector<1x8x8xf32>, vector<1x8x8xf32>, vector<1x8x8xf32>, vector<1x8x8xf32>, vector<1x8x8xf32>, vector<1x8x8xf32>, vector<1x8x8xf32>, vector<1x8x8xf32> -> vector<8x8x8xf32>
    %59 = vector.extract_strided_slice %22 {offsets = [0, 0], sizes = [8, 8], strides = [1, 1]} : vector<16x32xf32> to vector<8x8xf32>
    %60 = vector.extract_strided_slice %22 {offsets = [0, 8], sizes = [8, 8], strides = [1, 1]} : vector<16x32xf32> to vector<8x8xf32>
    %61 = vector.extract_strided_slice %22 {offsets = [0, 16], sizes = [8, 8], strides = [1, 1]} : vector<16x32xf32> to vector<8x8xf32>
    %62 = vector.extract_strided_slice %22 {offsets = [0, 24], sizes = [8, 8], strides = [1, 1]} : vector<16x32xf32> to vector<8x8xf32>
    %63 = vector.extract_strided_slice %22 {offsets = [8, 0], sizes = [8, 8], strides = [1, 1]} : vector<16x32xf32> to vector<8x8xf32>
    %64 = vector.extract_strided_slice %22 {offsets = [8, 8], sizes = [8, 8], strides = [1, 1]} : vector<16x32xf32> to vector<8x8xf32>
    %65 = vector.extract_strided_slice %22 {offsets = [8, 16], sizes = [8, 8], strides = [1, 1]} : vector<16x32xf32> to vector<8x8xf32>
    %66 = vector.extract_strided_slice %22 {offsets = [8, 24], sizes = [8, 8], strides = [1, 1]} : vector<16x32xf32> to vector<8x8xf32>
    %67 = vector.shape_cast %59 : vector<8x8xf32> to vector<1x8x8xf32>
    %68 = vector.shape_cast %60 : vector<8x8xf32> to vector<1x8x8xf32>
    %69 = vector.shape_cast %61 : vector<8x8xf32> to vector<1x8x8xf32>
    %70 = vector.shape_cast %62 : vector<8x8xf32> to vector<1x8x8xf32>
    %71 = vector.shape_cast %63 : vector<8x8xf32> to vector<1x8x8xf32>
    %72 = vector.shape_cast %64 : vector<8x8xf32> to vector<1x8x8xf32>
    %73 = vector.shape_cast %65 : vector<8x8xf32> to vector<1x8x8xf32>
    %74 = vector.shape_cast %66 : vector<8x8xf32> to vector<1x8x8xf32>
    %75 = tpu.concatenate %67, %68, %69, %70, %71, %72, %73, %74 in 0 : vector<1x8x8xf32>, vector<1x8x8xf32>, vector<1x8x8xf32>, vector<1x8x8xf32>, vector<1x8x8xf32>, vector<1x8x8xf32>, vector<1x8x8xf32>, vector<1x8x8xf32> -> vector<8x8x8xf32>
    "tpu.trace_start"() <{level = 10 : i32, message = "nqe,nke->nqk"}> : () -> ()
    %cst_25 = arith.constant dense<0.000000e+00> : vector<8x8x8xf32>
    %76 = tpu.matmul %41, %58, %cst_25 {dimension_numbers = #tpu.dot_dimension_numbers<[2], [2], [1], [1], [0, 0, 0, 1, 1, 1], [0], [0]>} : vector<8x8x8xf32>, vector<8x8x8xf32>, vector<8x8x8xf32> -> vector<8x8x8xf32>
    "tpu.trace_stop"() : () -> ()
    %cst_26 = arith.constant dense<0xFF800000> : vector<8x8xf32>
    %77 = vector.multi_reduction <maximumf>, %76, %cst_26 [2] : vector<8x8x8xf32> to vector<8x8xf32>
    %78 = vector.shape_cast %77 : vector<8x8xf32> to vector<8x8x1xf32>
    %79 = vector.broadcast %78 : vector<8x8x1xf32> to vector<8x8x8xf32>
    %80 = arith.subf %76, %79 : vector<8x8x8xf32>
    %81 = math.exp %80 : vector<8x8x8xf32>
    %cst_27 = arith.constant dense<0.000000e+00> : vector<8x8xf32>
    %82 = vector.multi_reduction <add>, %81, %cst_27 [2] : vector<8x8x8xf32> to vector<8x8xf32>
    %83 = vector.shape_cast %82 : vector<8x8xf32> to vector<8x8x1xf32>
    %84 = vector.broadcast %83 : vector<8x8x1xf32> to vector<8x8x8xf32>
    %85 = arith.divf %81, %84 : vector<8x8x8xf32>
    "tpu.trace_start"() <{level = 10 : i32, message = "nqk,nke->nqe"}> : () -> ()
    %cst_28 = arith.constant dense<0.000000e+00> : vector<8x8x8xf32>
    %86 = tpu.matmul %85, %75, %cst_28 {dimension_numbers = #tpu.dot_dimension_numbers<[2], [1], [1], [2], [0, 0, 0, 1, 1, 2], [0], [0]>} : vector<8x8x8xf32>, vector<8x8x8xf32>, vector<8x8x8xf32> -> vector<8x8x8xf32>
    "tpu.trace_stop"() : () -> ()
    %87 = vector.extract_strided_slice %86 {offsets = [0, 0, 0], sizes = [1, 8, 8], strides = [1, 1, 1]} : vector<8x8x8xf32> to vector<1x8x8xf32>
    %88 = vector.shape_cast %87 : vector<1x8x8xf32> to vector<8x8xf32>
    %89 = vector.extract_strided_slice %86 {offsets = [1, 0, 0], sizes = [1, 8, 8], strides = [1, 1, 1]} : vector<8x8x8xf32> to vector<1x8x8xf32>
    %90 = vector.shape_cast %89 : vector<1x8x8xf32> to vector<8x8xf32>
    %91 = vector.extract_strided_slice %86 {offsets = [2, 0, 0], sizes = [1, 8, 8], strides = [1, 1, 1]} : vector<8x8x8xf32> to vector<1x8x8xf32>
    %92 = vector.shape_cast %91 : vector<1x8x8xf32> to vector<8x8xf32>
    %93 = vector.extract_strided_slice %86 {offsets = [3, 0, 0], sizes = [1, 8, 8], strides = [1, 1, 1]} : vector<8x8x8xf32> to vector<1x8x8xf32>
    %94 = vector.shape_cast %93 : vector<1x8x8xf32> to vector<8x8xf32>
    %95 = tpu.concatenate %88, %90, %92, %94 in 1 : vector<8x8xf32>, vector<8x8xf32>, vector<8x8xf32>, vector<8x8xf32> -> vector<8x32xf32>
    %96 = vector.extract_strided_slice %86 {offsets = [4, 0, 0], sizes = [1, 8, 8], strides = [1, 1, 1]} : vector<8x8x8xf32> to vector<1x8x8xf32>
    %97 = vector.shape_cast %96 : vector<1x8x8xf32> to vector<8x8xf32>
    %98 = vector.extract_strided_slice %86 {offsets = [5, 0, 0], sizes = [1, 8, 8], strides = [1, 1, 1]} : vector<8x8x8xf32> to vector<1x8x8xf32>
    %99 = vector.shape_cast %98 : vector<1x8x8xf32> to vector<8x8xf32>
    %100 = vector.extract_strided_slice %86 {offsets = [6, 0, 0], sizes = [1, 8, 8], strides = [1, 1, 1]} : vector<8x8x8xf32> to vector<1x8x8xf32>
    %101 = vector.shape_cast %100 : vector<1x8x8xf32> to vector<8x8xf32>
    %102 = vector.extract_strided_slice %86 {offsets = [7, 0, 0], sizes = [1, 8, 8], strides = [1, 1, 1]} : vector<8x8x8xf32> to vector<1x8x8xf32>
    %103 = vector.shape_cast %102 : vector<1x8x8xf32> to vector<8x8xf32>
    %104 = tpu.concatenate %97, %99, %101, %103 in 1 : vector<8x8xf32>, vector<8x8xf32>, vector<8x8xf32>, vector<8x8xf32> -> vector<8x32xf32>
    %105 = tpu.concatenate %95, %104 in 0 : vector<8x32xf32>, vector<8x32xf32> -> vector<16x32xf32>
    %cst_29 = arith.constant dense<0.000000e+00> : vector<16x32xf32>
    %106 = tpu.matmul %105, %5, %cst_29 {dimension_numbers = #tpu.dot_dimension_numbers<[1], [0], [0], [1], [0, 0, 1, 1], [], []>} : vector<16x32xf32>, vector<32x32xf32>, vector<16x32xf32> -> vector<16x32xf32>
    %107 = vector.broadcast %10 : vector<1x32xf32> to vector<16x32xf32>
    %108 = arith.addf %106, %107 : vector<16x32xf32>
    %109 = arith.addf %0, %108 : vector<16x32xf32>
    %cst_30 = arith.constant dense<0.000000e+00> : vector<16xf32>
    %110 = vector.multi_reduction <add>, %109, %cst_30 [1] : vector<16x32xf32> to vector<16xf32>
    %111 = vector.shape_cast %110 : vector<16xf32> to vector<16x1xf32>
    %cst_31 = arith.constant 3.200000e+01 : f32
    %112 = vector.broadcast %cst_31 : f32 to vector<16x1xf32>
    %113 = arith.divf %111, %112 : vector<16x1xf32>
    %114 = vector.broadcast %113 : vector<16x1xf32> to vector<16x32xf32>
    %115 = arith.subf %109, %114 : vector<16x32xf32>
    %116 = arith.mulf %115, %115 : vector<16x32xf32>
    %cst_32 = arith.constant dense<0.000000e+00> : vector<16xf32>
    %117 = vector.multi_reduction <add>, %116, %cst_32 [1] : vector<16x32xf32> to vector<16xf32>
    %118 = vector.shape_cast %117 : vector<16xf32> to vector<16x1xf32>
    %cst_33 = arith.constant 3.200000e+01 : f32
    %119 = vector.broadcast %cst_33 : f32 to vector<16x1xf32>
    %120 = arith.divf %118, %119 : vector<16x1xf32>
    %cst_34 = arith.constant 9.99999974E-6 : f32
    %121 = vector.broadcast %cst_34 : f32 to vector<16x1xf32>
    %122 = arith.addf %120, %121 : vector<16x1xf32>
    %123 = math.rsqrt %122 : vector<16x1xf32>
    %124 = vector.broadcast %123 : vector<16x1xf32> to vector<16x32xf32>
    %125 = arith.mulf %115, %124 : vector<16x32xf32>
    %126 = vector.broadcast %13 : vector<1x32xf32> to vector<16x32xf32>
    %127 = arith.mulf %125, %126 : vector<16x32xf32>
    %128 = vector.broadcast %14 : vector<1x32xf32> to vector<16x32xf32>
    %129 = arith.addf %127, %128 : vector<16x32xf32>
    %cst_35 = arith.constant dense<0.000000e+00> : vector<16x64xf32>
    %130 = tpu.matmul %129, %6, %cst_35 {dimension_numbers = #tpu.dot_dimension_numbers<[1], [0], [0], [1], [0, 0, 1, 1], [], []>} : vector<16x32xf32>, vector<32x64xf32>, vector<16x64xf32> -> vector<16x64xf32>
    %131 = vector.broadcast %11 : vector<1x64xf32> to vector<16x64xf32>
    %132 = arith.addf %130, %131 : vector<16x64xf32>
    %cst_36 = arith.constant 0.000000e+00 : f32
    %133 = vector.broadcast %cst_36 : f32 to vector<16x64xf32>
    %134 = arith.maximumf %132, %133 : vector<16x64xf32>
    %cst_37 = arith.constant dense<0.000000e+00> : vector<16x32xf32>
    %135 = tpu.matmul %134, %7, %cst_37 {dimension_numbers = #tpu.dot_dimension_numbers<[1], [0], [0], [1], [0, 0, 1, 1], [], []>} : vector<16x64xf32>, vector<64x32xf32>, vector<16x32xf32> -> vector<16x32xf32>
    %136 = vector.broadcast %12 : vector<1x32xf32> to vector<16x32xf32>
    %137 = arith.addf %135, %136 : vector<16x32xf32>
    %138 = arith.addf %129, %137 : vector<16x32xf32>
    %cst_38 = arith.constant dense<0.000000e+00> : vector<16xf32>
    %139 = vector.multi_reduction <add>, %138, %cst_38 [1] : vector<16x32xf32> to vector<16xf32>
    %140 = vector.shape_cast %139 : vector<16xf32> to vector<16x1xf32>
    %cst_39 = arith.constant 3.200000e+01 : f32
    %141 = vector.broadcast %cst_39 : f32 to vector<16x1xf32>
    %142 = arith.divf %140, %141 : vector<16x1xf32>
    %143 = vector.broadcast %142 : vector<16x1xf32> to vector<16x32xf32>
    %144 = arith.subf %138, %143 : vector<16x32xf32>
    %145 = arith.mulf %144, %144 : vector<16x32xf32>
    %cst_40 = arith.constant dense<0.000000e+00> : vector<16xf32>
    %146 = vector.multi_reduction <add>, %145, %cst_40 [1] : vector<16x32xf32> to vector<16xf32>
    %147 = vector.shape_cast %146 : vector<16xf32> to vector<16x1xf32>
    %cst_41 = arith.constant 3.200000e+01 : f32
    %148 = vector.broadcast %cst_41 : f32 to vector<16x1xf32>
    %149 = arith.divf %147, %148 : vector<16x1xf32>
    %cst_42 = arith.constant 9.99999974E-6 : f32
    %150 = vector.broadcast %cst_42 : f32 to vector<16x1xf32>
    %151 = arith.addf %149, %150 : vector<16x1xf32>
    %152 = math.rsqrt %151 : vector<16x1xf32>
    %153 = vector.broadcast %152 : vector<16x1xf32> to vector<16x32xf32>
    %154 = arith.mulf %144, %153 : vector<16x32xf32>
    %155 = vector.broadcast %15 : vector<1x32xf32> to vector<16x32xf32>
    %156 = arith.mulf %154, %155 : vector<16x32xf32>
    %157 = vector.broadcast %16 : vector<1x32xf32> to vector<16x32xf32>
    %158 = arith.addf %156, %157 : vector<16x32xf32>
    %c0_43 = arith.constant 0 : index
    %c0_44 = arith.constant 0 : index
    %159 = vector.load %arg8[%c0_43, %c0_44] : memref<16x32xf32, #tpu.memory_space<vmem>>, vector<16x32xf32>
    tpu.vector_store %arg8[%c0_43, %c0_44], %158 {strides = array<i32>} : memref<16x32xf32, #tpu.memory_space<vmem>>, vector<16x32xf32>,
    return
  }
}

</mosaic_0001>

<llo_original>
// kernel: tpu_custom_call.1
$region0: #{tpu_custom_call.1}
  #allocation0 [shape = 'u32[]', space=smem, size = 0x4, offset = 0x4, fixed_abs, tag = 'smem constant byte address 0x4 - core index']
  #allocation1 [shape = 'u32[144,128]{1,0:T(1,128)}', space=vmem, size = 0x12000, scoped, tag = 'internal scratch']
  %s0 = inlined_call_operand.hbm [shape: f32[16,32], index: 0, kind: input, shape index: {}]
  %s1 = inlined_call_operand.hbm [shape: f32[16,32], index: 1, kind: input, shape index: {}]
  %s2 = inlined_call_operand.vmem [shape: f32[32,64], index: 2, kind: input, shape index: {}]
  %s3 = inlined_call_operand.vmem [shape: f32[32,32], index: 3, kind: input, shape index: {}]
  %s4 = inlined_call_operand.vmem [shape: f32[32,32], index: 4, kind: input, shape index: {}]
  %s5 = inlined_call_operand.hbm [shape: f32[32,64], index: 5, kind: input, shape index: {}]
  %s6 = inlined_call_operand.vmem [shape: f32[64,32], index: 6, kind: input, shape index: {}]
  %s7 = inlined_call_operand.hbm [shape: f32[16,128], index: 7, kind: input, shape index: {}]
  %s8 = inlined_call_operand.hbm [shape: f32[16,32], index: 8, kind: output, shape index: {}]
  %s9 = sld [smem:[#allocation0]]
  $region58: #{tpu_custom_call.1} parent=0
    _
  %s11 = ssub.s32 1, %s9
  %s12 = scalar_select 0, %s11, %s9
  $region1: #{tpu_custom_call.1} parent=0
    #allocation2 [shape = 'u8[8192]{0}', space=vmem, size = 0x2000, scoped, tag = 'input window, operand 0, single buffered']
    #allocation3 [shape = 's32[1]{0}', space=sflag, size = 0x4, scoped, tag = 'scoped memory for tpu_custom_call.1']
    #allocation4 [shape = 's32[1]{0}', space=sflag, size = 0x4, scoped, tag = 'scoped memory for tpu_custom_call.1']
    #allocation5 [shape = 'u8[8192]{0}', space=vmem, size = 0x2000, scoped, tag = 'input window, operand 1, single buffered']
    #allocation6 [shape = 's32[1]{0}', space=sflag, size = 0x4, scoped, tag = 'scoped memory for tpu_custom_call.1']
    #allocation7 [shape = 'u8[16384]{0}', space=vmem, size = 0x4000, scoped, tag = 'input window, operand 5, single buffered']
    #allocation8 [shape = 'u8[8192]{0}', space=vmem, size = 0x2000, scoped, tag = 'input window, operand 7, single buffered']
    #allocation9 [shape = 's32[1]{0}', space=sflag, size = 0x4, scoped, tag = 'scoped memory for tpu_custom_call.1']
    #allocation10 [shape = 'u8[8192]{0}', space=vmem, size = 0x2000, scoped, tag = 'output window, operand 0, single buffered']
    %13 = vsyncpa [#allocation3], 0
    %14 = vsyncpa [#allocation6], 0
    %15 = vsyncpa [#allocation9], 0
    %16 = vsyncpa [#allocation4], 0
    // Predicated region
    $region2: #{tpu_custom_call.1} parent=1 // pred_check
      _
    $region3: #{tpu_custom_call.1} parent=1 // pred_check_branch
      %18 = sbr.rel (0) target = $region5
    $region4: #{tpu_custom_call.1} parent=1 // pred_region
      %s20 = ssub.s32 256, 256
      %21 = vsyncadd [#allocation3], %s20
      %s22 = sshll.u32 [#allocation2], 4
      %s23 = int_to_ptr.vmem [resolvable:$true] %s22
      %28 = dma.hbm_to_vmem [thread:$0]  %s0, 256, %s23, [#allocation3], 128, 128, 8
    $region5: #{tpu_custom_call.1} parent=1 // pred_fallthru
      _
    // Predicated region
    $region6: #{tpu_custom_call.1} parent=1 // pred_check
      _
    $region7: #{tpu_custom_call.1} parent=1 // pred_check_branch
      %30 = sbr.rel (0) target = $region9
    $region8: #{tpu_custom_call.1} parent=1 // pred_region
      %s32 = ssub.s32 256, 256
      %33 = vsyncadd [#allocation6], %s32
      %s34 = sshll.u32 [#allocation5], 4
      %s35 = int_to_ptr.vmem [resolvable:$true] %s34
      %40 = dma.hbm_to_vmem [thread:$0]  %s1, 256, %s35, [#allocation6], 128, 128, 8
    $region9: #{tpu_custom_call.1} parent=1 // pred_fallthru
      _
    // Predicated region
    $region10: #{tpu_custom_call.1} parent=1 // pred_check
      _
    $region11: #{tpu_custom_call.1} parent=1 // pred_check_branch
      %42 = sbr.rel (0) target = $region13
    $region12: #{tpu_custom_call.1} parent=1 // pred_region
      _
    $region13: #{tpu_custom_call.1} parent=1 // pred_fallthru
      _
    // Predicated region
    $region14: #{tpu_custom_call.1} parent=1 // pred_check
      _
    $region15: #{tpu_custom_call.1} parent=1 // pred_check_branch
      %44 = sbr.rel (0) target = $region17
    $region16: #{tpu_custom_call.1} parent=1 // pred_region
      _
    $region17: #{tpu_custom_call.1} parent=1 // pred_fallthru
      _
    // Predicated region
    $region18: #{tpu_custom_call.1} parent=1 // pred_check
      _
    $region19: #{tpu_custom_call.1} parent=1 // pred_check_branch
      %46 = sbr.rel (0) target = $region21
    $region20: #{tpu_custom_call.1} parent=1 // pred_region
      _
    $region21: #{tpu_custom_call.1} parent=1 // pred_fallthru
      _
    // Predicated region
    $region22: #{tpu_custom_call.1} parent=1 // pred_check
      _
    $region23: #{tpu_custom_call.1} parent=1 // pred_check_branch
      %48 = sbr.rel (0) target = $region25
    $region24: #{tpu_custom_call.1} parent=1 // pred_region
      %s50 = ssub.s32 512, 512
      %51 = vsyncadd [#allocation6], %s50
      %s52 = sshll.u32 [#allocation7], 4
      %s53 = int_to_ptr.vmem [resolvable:$true] %s52
      %58 = dma.hbm_to_vmem [thread:$0]  %s5, 512, %s53, [#allocation6], 128, 128, 8
    $region25: #{tpu_custom_call.1} parent=1 // pred_fallthru
      _
    // Predicated region
    $region26: #{tpu_custom_call.1} parent=1 // pred_check
      _
    $region27: #{tpu_custom_call.1} parent=1 // pred_check_branch
      %60 = sbr.rel (0) target = $region29
    $region28: #{tpu_custom_call.1} parent=1 // pred_region
      _
    $region29: #{tpu_custom_call.1} parent=1 // pred_fallthru
      _
    // Predicated region
    $region30: #{tpu_custom_call.1} parent=1 // pred_check
      _
    $region31: #{tpu_custom_call.1} parent=1 // pred_check_branch
      %62 = sbr.rel (0) target = $region33
    $region32: #{tpu_custom_call.1} parent=1 // pred_region
      %s64 = ssub.s32 256, 256
      %65 = vsyncadd [#allocation9], %s64
      %s66 = sshll.u32 [#allocation8], 4
      %s67 = int_to_ptr.vmem [resolvable:$true] %s66
      %72 = dma.hbm_to_vmem [thread:$0]  %s7, 256, %s67, [#allocation9], 128, 128, 8
    $region33: #{tpu_custom_call.1} parent=1 // pred_fallthru
      _
    // Predicated region
    $region34: #{tpu_custom_call.1} parent=1 // pred_check
      _
    $region35: #{tpu_custom_call.1} parent=1 // pred_check_branch
      %74 = sbr.rel (0) target = $region37
    $region36: #{tpu_custom_call.1} parent=1 // pred_region
      %75 = dma.done [#allocation3], 256
    $region37: #{tpu_custom_call.1} parent=1 // pred_fallthru
      _
    // Predicated region
    $region38: #{tpu_custom_call.1} parent=1 // pred_check
      _
    $region39: #{tpu_custom_call.1} parent=1 // pred_check_branch
      %77 = sbr.rel (0) target = $region41
    $region40: #{tpu_custom_call.1} parent=1 // pred_region
      %78 = dma.done [#allocation6], 256
    $region41: #{tpu_custom_call.1} parent=1 // pred_fallthru
      _
    // Predicated region
    $region42: #{tpu_custom_call.1} parent=1 // pred_check
      _
    $region43: #{tpu_custom_call.1} parent=1 // pred_check_branch
      %80 = sbr.rel (0) target = $region45
    $region44: #{tpu_custom_call.1} parent=1 // pred_region
      %81 = dma.done [#allocation6], 512
    $region45: #{tpu_custom_call.1} parent=1 // pred_fallthru
      _
    // Predicated region
    $region46: #{tpu_custom_call.1} parent=1 // pred_check
      _
    $region47: #{tpu_custom_call.1} parent=1 // pred_check_branch
      %83 = sbr.rel (0) target = $region49
    $region48: #{tpu_custom_call.1} parent=1 // pred_region
      %84 = dma.done [#allocation9], 256
    $region49: #{tpu_custom_call.1} parent=1 // pred_fallthru
      _
    %v85 = vld [vmem:[#allocation2] sm:$0xff]
    %v86 = vld [vmem:[#allocation2 + $0x8] sm:$0xff]
    %v87 = vld [vmem:[#allocation5] sm:$0xff]
    %v88 = vld [vmem:[#allocation5 + $0x8] sm:$0xff]
    %v89 = vadd.f32 %v85, %v87
    %v90 = vadd.f32 %v86, %v88
    %v91 = vld [vmem:[%s2] sm:$0xff]
    %v92 = vld [vmem:[%s2 + $0x8] sm:$0xff]
    %v93 = vld [vmem:[%s2 + $0x10] sm:$0xff]
    %v94 = vld [vmem:[%s2 + $0x18] sm:$0xff]
    %v95 = vld [vmem:[%s3] sm:$0xff]
    %v96 = vld [vmem:[%s3 + $0x8] sm:$0xff]
    %v97 = vld [vmem:[%s3 + $0x10] sm:$0xff]
    %v98 = vld [vmem:[%s3 + $0x18] sm:$0xff]
    %v99 = vld [vmem:[%s4] sm:$0xff]
    %v100 = vld [vmem:[%s4 + $0x8] sm:$0xff]
    %v101 = vld [vmem:[%s4 + $0x10] sm:$0xff]
    %v102 = vld [vmem:[%s4 + $0x18] sm:$0xff]
    %v103 = vld [vmem:[#allocation7] sm:$0xff]
    %v104 = vld [vmem:[#allocation7 + $0x8] sm:$0xff]
    %v105 = vld [vmem:[#allocation7 + $0x10] sm:$0xff]
    %v106 = vld [vmem:[#allocation7 + $0x18] sm:$0xff]
    %v107 = vld [vmem:[%s6] sm:$0xff]
    %v108 = vld [vmem:[%s6 + $0x8] sm:$0xff]
    %v109 = vld [vmem:[%s6 + $0x10] sm:$0xff]
    %v110 = vld [vmem:[%s6 + $0x18] sm:$0xff]
    %v111 = vld [vmem:[%s6 + $0x20] sm:$0xff]
    %v112 = vld [vmem:[%s6 + $0x28] sm:$0xff]
    %v113 = vld [vmem:[%s6 + $0x30] sm:$0xff]
    %v114 = vld [vmem:[%s6 + $0x38] sm:$0xff]
    %v115 = vld [vmem:[#allocation8] sm:$0x1]
    %v116 = vld [vmem:[#allocation8 + $0x1] sm:$0x1]
    %v117 = vld [vmem:[#allocation8 + $0x2] sm:$0x1]
    %v118 = vld [vmem:[#allocation8 + $0x3] sm:$0x1]
    %v119 = vld [vmem:[#allocation8 + $0x4] sm:$0x1]
    %v120 = vld [vmem:[#allocation8 + $0x5] sm:$0x1]
    %v121 = vld [vmem:[#allocation8 + $0x6] sm:$0x1]
    %v122 = vld [vmem:[#allocation8 + $0x7] sm:$0x1]
    %v123 = vld [vmem:[#allocation8 + $0x8] sm:$0x1]
    %v124 = vlaneseq
    %v125 = vshrl.u32 %v124, 7
    %v126 = vsub.s32 0, %v125
    %v127 = vrot.slane %v115, %v126
    %vm128 = vcmask 261120
    %v130 = vsel %vm128, %v89, 0
    %v133 = vsel %vm128, %v90, 0
    %135 = vmatprep.subr.mxu0 0.0
    %136 = vmatpush1.msra.mxu0 0.0
    %137 = vmatprep.subr.mxu0 0.0
    %138 = vmatpush1.msra.mxu0 0.0
    %139 = vmatprep.subr.mxu0 0.0
    %140 = vmatpush1.msra.mxu0 0.0
    %141 = vmatprep.subr.mxu0 0.0
    %142 = vmatpush1.msra.mxu0 0.0
    %143 = vmatprep.subr.mxu0 0.0
    %144 = vmatpush1.msra.mxu0 0.0
    %145 = vmatprep.subr.mxu0 0.0
    %146 = vmatpush1.msra.mxu0 0.0
    %147 = vmatprep.subr.mxu0 0.0
    %148 = vmatpush1.msra.mxu0 0.0
    %149 = vmatprep.subr.mxu0 0.0
    %150 = vmatpush1.msra.mxu0 0.0
    %151 = vmatprep.subr.mxu0 0.0
    %152 = vmatpush1.msra.mxu0 0.0
    %153 = vmatprep.subr.mxu0 0.0
    %154 = vmatpush1.msra.mxu0 0.0
    %155 = vmatprep.subr.mxu0 0.0
    %156 = vmatpush1.msra.mxu0 0.0
    %157 = vmatprep.subr.mxu0 0.0
    %158 = vmatpush1.msra.mxu0 0.0
    %159 = vmatprep.subr.mxu0 0.0
    %160 = vmatpush1.msra.mxu0 %v94
    %161 = vmatprep.subr.mxu0 0.0
    %162 = vmatpush1.msra.mxu0 %v93
    %163 = vmatprep.subr.mxu0 0.0
    %164 = vmatpush1.msra.mxu0 %v92
    %165 = vmatprep.subr.mxu0 0.0
    %166 = vmatpush1.msra.mxu0 %v91
    %167 = vmatprep.subr.mxu0 0.0
    %168 = vmatpush2.msra.mxu0 0.0
    %169 = vmatprep.subr.mxu0 0.0
    %170 = vmatpush2.msra.mxu0 0.0
    %171 = vmatprep.subr.mxu0 0.0
    %172 = vmatpush2.msra.mxu0 0.0
    %173 = vmatprep.subr.mxu0 0.0
    %174 = vmatpush2.msra.mxu0 0.0
    %175 = vmatprep.subr.mxu0 0.0
    %176 = vmatpush2.msra.mxu0 0.0
    %177 = vmatprep.subr.mxu0 0.0
    %178 = vmatpush2.msra.mxu0 0.0
    %179 = vmatprep.subr.mxu0 0.0
    %180 = vmatpush2.msra.mxu0 0.0
    %181 = vmatprep.subr.mxu0 0.0
    %182 = vmatpush2.msra.mxu0 0.0
    %183 = vmatprep.subr.mxu0 0.0
    %184 = vmatpush2.msra.mxu0 0.0
    %185 = vmatprep.subr.mxu0 0.0
    %186 = vmatpush2.msra.mxu0 0.0
    %187 = vmatprep.subr.mxu0 0.0
    %188 = vmatpush2.msra.mxu0 0.0
    %189 = vmatprep.subr.mxu0 0.0
    %190 = vmatpush2.msra.mxu0 0.0
    %191 = vmatprep.subr.mxu0 0.0
    %192 = vmatpush2.msra.mxu0 0.0
    %193 = vmatprep.subr.mxu0 0.0
    %194 = vmatpush2.msra.mxu0 0.0
    %195 = vmatprep.subr.mxu0 0.0
    %196 = vmatpush2.msra.mxu0 0.0
    %197 = vmatprep.subr.mxu0 0.0
    %198 = vmatpush2.msra.mxu0 0.0
    %199 = vmatprep.mubr.f32.mxu0 0.0
    %200 = vmatmul.mubr.f32.gmra.mxu0 %v130
    %v201 = vpop.f32.mrf.mxu0
    %v202 = vadd.f32 %v127, %v201
    %v203 = vpop.f32.mrf.mxu0
    %204 = vmatprep.mubr.f32.mxu0 0.0
    %205 = vmatmul.mubr.f32.gmra.mxu0 %v133
    %v206 = vpop.f32.mrf.mxu0
    %v207 = vadd.f32 %v127, %v206
    %v208 = vpop.f32.mrf.mxu0
    %209 = vdwg.mxu0
    %v210 = vlaneseq
    %v211 = vshrl.u32 %v210, 7
    %v212 = vsub.s32 0, %v211
    %v213 = vrot.slane %v116, %v212
    %v215 = vsel %vm128, %v85, 0
    %v218 = vsel %vm128, %v86, 0
    %220 = vmatprep.subr.mxu0 0.0
    %221 = vmatpush1.msra.mxu0 0.0
    %222 = vmatprep.subr.mxu0 0.0
    %223 = vmatpush1.msra.mxu0 0.0
    %224 = vmatprep.subr.mxu0 0.0
    %225 = vmatpush1.msra.mxu0 0.0
    %226 = vmatprep.subr.mxu0 0.0
    %227 = vmatpush1.msra.mxu0 0.0
    %228 = vmatprep.subr.mxu0 0.0
    %229 = vmatpush1.msra.mxu0 0.0
    %230 = vmatprep.subr.mxu0 0.0
    %231 = vmatpush1.msra.mxu0 0.0
    %232 = vmatprep.subr.mxu0 0.0
    %233 = vmatpush1.msra.mxu0 0.0
    %234 = vmatprep.subr.mxu0 0.0
    %235 = vmatpush1.msra.mxu0 0.0
    %236 = vmatprep.subr.mxu0 0.0
    %237 = vmatpush1.msra.mxu0 0.0
    %238 = vmatprep.subr.mxu0 0.0
    %239 = vmatpush1.msra.mxu0 0.0
    %240 = vmatprep.subr.mxu0 0.0
    %241 = vmatpush1.msra.mxu0 0.0
    %242 = vmatprep.subr.mxu0 0.0
    %243 = vmatpush1.msra.mxu0 0.0
    %244 = vmatprep.subr.mxu0 0.0
    %245 = vmatpush1.msra.mxu0 %v98
    %246 = vmatprep.subr.mxu0 0.0
    %247 = vmatpush1.msra.mxu0 %v97
    %248 = vmatprep.subr.mxu0 0.0
    %249 = vmatpush1.msra.mxu0 %v96
    %250 = vmatprep.subr.mxu0 0.0
    %251 = vmatpush1.msra.mxu0 %v95
    %252 = vmatprep.subr.mxu0 0.0
    %253 = vmatpush2.msra.mxu0 0.0
    %254 = vmatprep.subr.mxu0 0.0
    %255 = vmatpush2.msra.mxu0 0.0
    %256 = vmatprep.subr.mxu0 0.0
    %257 = vmatpush2.msra.mxu0 0.0
    %258 = vmatprep.subr.mxu0 0.0
    %259 = vmatpush2.msra.mxu0 0.0
    %260 = vmatprep.subr.mxu0 0.0
    %261 = vmatpush2.msra.mxu0 0.0
    %262 = vmatprep.subr.mxu0 0.0
    %263 = vmatpush2.msra.mxu0 0.0
    %264 = vmatprep.subr.mxu0 0.0
    %265 = vmatpush2.msra.mxu0 0.0
    %266 = vmatprep.subr.mxu0 0.0
    %267 = vmatpush2.msra.mxu0 0.0
    %268 = vmatprep.subr.mxu0 0.0
    %269 = vmatpush2.msra.mxu0 0.0
    %270 = vmatprep.subr.mxu0 0.0
    %271 = vmatpush2.msra.mxu0 0.0
    %272 = vmatprep.subr.mxu0 0.0
    %273 = vmatpush2.msra.mxu0 0.0
    %274 = vmatprep.subr.mxu0 0.0
    %275 = vmatpush2.msra.mxu0 0.0
    %276 = vmatprep.subr.mxu0 0.0
    %277 = vmatpush2.msra.mxu0 0.0
    %278 = vmatprep.subr.mxu0 0.0
    %279 = vmatpush2.msra.mxu0 0.0
    %280 = vmatprep.subr.mxu0 0.0
    %281 = vmatpush2.msra.mxu0 0.0
    %282 = vmatprep.subr.mxu0 0.0
    %283 = vmatpush2.msra.mxu0 0.0
    %284 = vmatprep.mubr.f32.mxu0 0.0
    %285 = vmatmul.mubr.f32.gmra.mxu0 %v215
    %v286 = vpop.f32.mrf.mxu0
    %v287 = vadd.f32 %v213, %v286
    %v288 = vpop.f32.mrf.mxu0
    %289 = vmatprep.mubr.f32.mxu0 0.0
    %290 = vmatmul.mubr.f32.gmra.mxu0 %v218
    %v291 = vpop.f32.mrf.mxu0
    %v292 = vadd.f32 %v213, %v291
    %v293 = vpop.f32.mrf.mxu0
    %294 = vdwg.mxu0
    %296 = vrot.lane.b32.xlu0 %v202, 120
    %v297 = vpop.permute.xlu0 %296
    %299 = vrot.lane.b32.xlu0 %v202, 112
    %v300 = vpop.permute.xlu0 %299
    %302 = vrot.lane.b32.xlu0 %v202, 104
    %v303 = vpop.permute.xlu0 %302
    %306 = vrot.lane.b32.xlu0 %v207, 120
    %v307 = vpop.permute.xlu0 %306
    %309 = vrot.lane.b32.xlu0 %v207, 112
    %v310 = vpop.permute.xlu0 %309
    %312 = vrot.lane.b32.xlu0 %v207, 104
    %v313 = vpop.permute.xlu0 %312
    %v315 = vmul.f32 %v202, 0.35355338
    %v316 = vmul.f32 %v297, 0.35355338
    %v317 = vmul.f32 %v300, 0.35355338
    %v318 = vmul.f32 %v303, 0.35355338
    %v319 = vmul.f32 %v207, 0.35355338
    %v320 = vmul.f32 %v307, 0.35355338
    %v321 = vmul.f32 %v310, 0.35355338
    %v322 = vmul.f32 %v313, 0.35355338
    %324 = vrot.lane.b32.xlu0 %v287, 120
    %v325 = vpop.permute.xlu0 %324
    %327 = vrot.lane.b32.xlu0 %v287, 112
    %v328 = vpop.permute.xlu0 %327
    %330 = vrot.lane.b32.xlu0 %v287, 104
    %v331 = vpop.permute.xlu0 %330
    %334 = vrot.lane.b32.xlu0 %v292, 120
    %v335 = vpop.permute.xlu0 %334
    %337 = vrot.lane.b32.xlu0 %v292, 112
    %v338 = vpop.permute.xlu0 %337
    %340 = vrot.lane.b32.xlu0 %v292, 104
    %v341 = vpop.permute.xlu0 %340
    %343 = vrot.lane.b32.xlu0 %v202, 96
    %v344 = vpop.permute.xlu0 %343
    %vm345 = vcmask 64512
    %v347 = vsel %vm345, %v315, 0
    %v349 = vsel %vm345, %v344, 0
    %351 = vmatprep.subr.mxu0 0.0
    %352 = vmatpush1.xpose.msra.mxu0 0.0
    %353 = vmatprep.subr.mxu0 0.0
    %354 = vmatpush1.xpose.msra.mxu0 0.0
    %355 = vmatprep.subr.mxu0 0.0
    %356 = vmatpush1.xpose.msra.mxu0 0.0
    %357 = vmatprep.subr.mxu0 0.0
    %358 = vmatpush1.xpose.msra.mxu0 0.0
    %359 = vmatprep.subr.mxu0 0.0
    %360 = vmatpush1.xpose.msra.mxu0 0.0
    %361 = vmatprep.subr.mxu0 0.0
    %362 = vmatpush1.xpose.msra.mxu0 0.0
    %363 = vmatprep.subr.mxu0 0.0
    %364 = vmatpush1.xpose.msra.mxu0 0.0
    %365 = vmatprep.subr.mxu0 0.0
    %366 = vmatpush1.xpose.msra.mxu0 0.0
    %367 = vmatprep.subr.mxu0 0.0
    %368 = vmatpush1.xpose.msra.mxu0 0.0
    %369 = vmatprep.subr.mxu0 0.0
    %370 = vmatpush1.xpose.msra.mxu0 0.0
    %371 = vmatprep.subr.mxu0 0.0
    %372 = vmatpush1.xpose.msra.mxu0 0.0
    %373 = vmatprep.subr.mxu0 0.0
    %374 = vmatpush1.xpose.msra.mxu0 0.0
    %375 = vmatprep.subr.mxu0 0.0
    %376 = vmatpush1.xpose.msra.mxu0 0.0
    %377 = vmatprep.subr.mxu0 0.0
    %378 = vmatpush1.xpose.msra.mxu0 0.0
    %379 = vmatprep.subr.mxu0 0.0
    %380 = vmatpush1.xpose.msra.mxu0 0.0
    %381 = vmatprep.subr.mxu0 0.0
    %382 = vmatpush1.xpose.msra.mxu0 %v349
    %383 = vmatprep.subr.mxu0 0.0
    %384 = vmatpush2.xpose.msra.mxu0 0.0
    %385 = vmatprep.subr.mxu0 0.0
    %386 = vmatpush2.xpose.msra.mxu0 0.0
    %387 = vmatprep.subr.mxu0 0.0
    %388 = vmatpush2.xpose.msra.mxu0 0.0
    %389 = vmatprep.subr.mxu0 0.0
    %390 = vmatpush2.xpose.msra.mxu0 0.0
    %391 = vmatprep.subr.mxu0 0.0
    %392 = vmatpush2.xpose.msra.mxu0 0.0
    %393 = vmatprep.subr.mxu0 0.0
    %394 = vmatpush2.xpose.msra.mxu0 0.0
    %395 = vmatprep.subr.mxu0 0.0
    %396 = vmatpush2.xpose.msra.mxu0 0.0
    %397 = vmatprep.subr.mxu0 0.0
    %398 = vmatpush2.xpose.msra.mxu0 0.0
    %399 = vmatprep.subr.mxu0 0.0
    %400 = vmatpush2.xpose.msra.mxu0 0.0
    %401 = vmatprep.subr.mxu0 0.0
    %402 = vmatpush2.xpose.msra.mxu0 0.0
    %403 = vmatprep.subr.mxu0 0.0
    %404 = vmatpush2.xpose.msra.mxu0 0.0
    %405 = vmatprep.subr.mxu0 0.0
    %406 = vmatpush2.xpose.msra.mxu0 0.0
    %407 = vmatprep.subr.mxu0 0.0
    %408 = vmatpush2.xpose.msra.mxu0 0.0
    %409 = vmatprep.subr.mxu0 0.0
    %410 = vmatpush2.xpose.msra.mxu0 0.0
    %411 = vmatprep.subr.mxu0 0.0
    %412 = vmatpush2.xpose.msra.mxu0 0.0
    %413 = vmatprep.subr.mxu0 0.0
    %414 = vmatpush2.xpose.msra.mxu0 0.0
    %415 = vmatprep.mubr.f32.mxu0 0.0
    %416 = vmatmul.mubr.f32.gmra.mxu0 %v347
    %v417 = vpop.f32.mrf.mxu0
    %v418 = vadd.f32 0.0, %v417
    %v419 = vpop.f32.mrf.mxu0
    %420 = vdwg.mxu0
    %421 = vrot.lane.b32.xlu0 %v297, 96
    %v422 = vpop.permute.xlu0 %421
    %v424 = vsel %vm345, %v316, 0
    %v426 = vsel %vm345, %v422, 0
    %428 = vmatprep.subr.mxu0 0.0
    %429 = vmatpush1.xpose.msra.mxu0 0.0
    %430 = vmatprep.subr.mxu0 0.0
    %431 = vmatpush1.xpose.msra.mxu0 0.0
    %432 = vmatprep.subr.mxu0 0.0
    %433 = vmatpush1.xpose.msra.mxu0 0.0
    %434 = vmatprep.subr.mxu0 0.0
    %435 = vmatpush1.xpose.msra.mxu0 0.0
    %436 = vmatprep.subr.mxu0 0.0
    %437 = vmatpush1.xpose.msra.mxu0 0.0
    %438 = vmatprep.subr.mxu0 0.0
    %439 = vmatpush1.xpose.msra.mxu0 0.0
    %440 = vmatprep.subr.mxu0 0.0
    %441 = vmatpush1.xpose.msra.mxu0 0.0
    %442 = vmatprep.subr.mxu0 0.0
    %443 = vmatpush1.xpose.msra.mxu0 0.0
    %444 = vmatprep.subr.mxu0 0.0
    %445 = vmatpush1.xpose.msra.mxu0 0.0
    %446 = vmatprep.subr.mxu0 0.0
    %447 = vmatpush1.xpose.msra.mxu0 0.0
    %448 = vmatprep.subr.mxu0 0.0
    %449 = vmatpush1.xpose.msra.mxu0 0.0
    %450 = vmatprep.subr.mxu0 0.0
    %451 = vmatpush1.xpose.msra.mxu0 0.0
    %452 = vmatprep.subr.mxu0 0.0
    %453 = vmatpush1.xpose.msra.mxu0 0.0
    %454 = vmatprep.subr.mxu0 0.0
    %455 = vmatpush1.xpose.msra.mxu0 0.0
    %456 = vmatprep.subr.mxu0 0.0
    %457 = vmatpush1.xpose.msra.mxu0 0.0
    %458 = vmatprep.subr.mxu0 0.0
    %459 = vmatpush1.xpose.msra.mxu0 %v426
    %460 = vmatprep.subr.mxu0 0.0
    %461 = vmatpush2.xpose.msra.mxu0 0.0
    %462 = vmatprep.subr.mxu0 0.0
    %463 = vmatpush2.xpose.msra.mxu0 0.0
    %464 = vmatprep.subr.mxu0 0.0
    %465 = vmatpush2.xpose.msra.mxu0 0.0
    %466 = vmatprep.subr.mxu0 0.0
    %467 = vmatpush2.xpose.msra.mxu0 0.0
    %468 = vmatprep.subr.mxu0 0.0
    %469 = vmatpush2.xpose.msra.mxu0 0.0
    %470 = vmatprep.subr.mxu0 0.0
    %471 = vmatpush2.xpose.msra.mxu0 0.0
    %472 = vmatprep.subr.mxu0 0.0
    %473 = vmatpush2.xpose.msra.mxu0 0.0
    %474 = vmatprep.subr.mxu0 0.0
    %475 = vmatpush2.xpose.msra.mxu0 0.0
    %476 = vmatprep.subr.mxu0 0.0
    %477 = vmatpush2.xpose.msra.mxu0 0.0
    %478 = vmatprep.subr.mxu0 0.0
    %479 = vmatpush2.xpose.msra.mxu0 0.0
    %480 = vmatprep.subr.mxu0 0.0
    %481 = vmatpush2.xpose.msra.mxu0 0.0
    %482 = vmatprep.subr.mxu0 0.0
    %483 = vmatpush2.xpose.msra.mxu0 0.0
    %484 = vmatprep.subr.mxu0 0.0
    %485 = vmatpush2.xpose.msra.mxu0 0.0
    %486 = vmatprep.subr.mxu0 0.0
    %487 = vmatpush2.xpose.msra.mxu0 0.0
    %488 = vmatprep.subr.mxu0 0.0
    %489 = vmatpush2.xpose.msra.mxu0 0.0
    %490 = vmatprep.subr.mxu0 0.0
    %491 = vmatpush2.xpose.msra.mxu0 0.0
    %492 = vmatprep.mubr.f32.mxu0 0.0
    %493 = vmatmul.mubr.f32.gmra.mxu0 %v424
    %v494 = vpop.f32.mrf.mxu0
    %v495 = vadd.f32 0.0, %v494
    %v496 = vpop.f32.mrf.mxu0
    %497 = vdwg.mxu0
    %498 = vrot.lane.b32.xlu0 %v300, 96
    %v499 = vpop.permute.xlu0 %498
    %v501 = vsel %vm345, %v317, 0
    %v503 = vsel %vm345, %v499, 0
    %505 = vmatprep.subr.mxu0 0.0
    %506 = vmatpush1.xpose.msra.mxu0 0.0
    %507 = vmatprep.subr.mxu0 0.0
    %508 = vmatpush1.xpose.msra.mxu0 0.0
    %509 = vmatprep.subr.mxu0 0.0
    %510 = vmatpush1.xpose.msra.mxu0 0.0
    %511 = vmatprep.subr.mxu0 0.0
    %512 = vmatpush1.xpose.msra.mxu0 0.0
    %513 = vmatprep.subr.mxu0 0.0
    %514 = vmatpush1.xpose.msra.mxu0 0.0
    %515 = vmatprep.subr.mxu0 0.0
    %516 = vmatpush1.xpose.msra.mxu0 0.0
    %517 = vmatprep.subr.mxu0 0.0
    %518 = vmatpush1.xpose.msra.mxu0 0.0
    %519 = vmatprep.subr.mxu0 0.0
    %520 = vmatpush1.xpose.msra.mxu0 0.0
    %521 = vmatprep.subr.mxu0 0.0
    %522 = vmatpush1.xpose.msra.mxu0 0.0
    %523 = vmatprep.subr.mxu0 0.0
    %524 = vmatpush1.xpose.msra.mxu0 0.0
    %525 = vmatprep.subr.mxu0 0.0
    %526 = vmatpush1.xpose.msra.mxu0 0.0
    %527 = vmatprep.subr.mxu0 0.0
    %528 = vmatpush1.xpose.msra.mxu0 0.0
    %529 = vmatprep.subr.mxu0 0.0
    %530 = vmatpush1.xpose.msra.mxu0 0.0
    %531 = vmatprep.subr.mxu0 0.0
    %532 = vmatpush1.xpose.msra.mxu0 0.0
    %533 = vmatprep.subr.mxu0 0.0
    %534 = vmatpush1.xpose.msra.mxu0 0.0
    %535 = vmatprep.subr.mxu0 0.0
    %536 = vmatpush1.xpose.msra.mxu0 %v503
    %537 = vmatprep.subr.mxu0 0.0
    %538 = vmatpush2.xpose.msra.mxu0 0.0
    %539 = vmatprep.subr.mxu0 0.0
    %540 = vmatpush2.xpose.msra.mxu0 0.0
    %541 = vmatprep.subr.mxu0 0.0
    %542 = vmatpush2.xpose.msra.mxu0 0.0
    %543 = vmatprep.subr.mxu0 0.0
    %544 = vmatpush2.xpose.msra.mxu0 0.0
    %545 = vmatprep.subr.mxu0 0.0
    %546 = vmatpush2.xpose.msra.mxu0 0.0
    %547 = vmatprep.subr.mxu0 0.0
    %548 = vmatpush2.xpose.msra.mxu0 0.0
    %549 = vmatprep.subr.mxu0 0.0
    %550 = vmatpush2.xpose.msra.mxu0 0.0
    %551 = vmatprep.subr.mxu0 0.0
    %552 = vmatpush2.xpose.msra.mxu0 0.0
    %553 = vmatprep.subr.mxu0 0.0
    %554 = vmatpush2.xpose.msra.mxu0 0.0
    %555 = vmatprep.subr.mxu0 0.0
    %556 = vmatpush2.xpose.msra.mxu0 0.0
    %557 = vmatprep.subr.mxu0 0.0
    %558 = vmatpush2.xpose.msra.mxu0 0.0
    %559 = vmatprep.subr.mxu0 0.0
    %560 = vmatpush2.xpose.msra.mxu0 0.0
    %561 = vmatprep.subr.mxu0 0.0
    %562 = vmatpush2.xpose.msra.mxu0 0.0
    %563 = vmatprep.subr.mxu0 0.0
    %564 = vmatpush2.xpose.msra.mxu0 0.0
    %565 = vmatprep.subr.mxu0 0.0
    %566 = vmatpush2.xpose.msra.mxu0 0.0
    %567 = vmatprep.subr.mxu0 0.0
    %568 = vmatpush2.xpose.msra.mxu0 0.0
    %569 = vmatprep.mubr.f32.mxu0 0.0
    %570 = vmatmul.mubr.f32.gmra.mxu0 %v501
    %v571 = vpop.f32.mrf.mxu0
    %v572 = vadd.f32 0.0, %v571
    %v573 = vpop.f32.mrf.mxu0
    %574 = vdwg.mxu0
    %575 = vrot.lane.b32.xlu0 %v303, 96
    %v576 = vpop.permute.xlu0 %575
    %v578 = vsel %vm345, %v318, 0
    %v580 = vsel %vm345, %v576, 0
    %582 = vmatprep.subr.mxu0 0.0
    %583 = vmatpush1.xpose.msra.mxu0 0.0
    %584 = vmatprep.subr.mxu0 0.0
    %585 = vmatpush1.xpose.msra.mxu0 0.0
    %586 = vmatprep.subr.mxu0 0.0
    %587 = vmatpush1.xpose.msra.mxu0 0.0
    %588 = vmatprep.subr.mxu0 0.0
    %589 = vmatpush1.xpose.msra.mxu0 0.0
    %590 = vmatprep.subr.mxu0 0.0
    %591 = vmatpush1.xpose.msra.mxu0 0.0
    %592 = vmatprep.subr.mxu0 0.0
    %593 = vmatpush1.xpose.msra.mxu0 0.0
    %594 = vmatprep.subr.mxu0 0.0
    %595 = vmatpush1.xpose.msra.mxu0 0.0
    %596 = vmatprep.subr.mxu0 0.0
    %597 = vmatpush1.xpose.msra.mxu0 0.0
    %598 = vmatprep.subr.mxu0 0.0
    %599 = vmatpush1.xpose.msra.mxu0 0.0
    %600 = vmatprep.subr.mxu0 0.0
    %601 = vmatpush1.xpose.msra.mxu0 0.0
    %602 = vmatprep.subr.mxu0 0.0
    %603 = vmatpush1.xpose.msra.mxu0 0.0
    %604 = vmatprep.subr.mxu0 0.0
    %605 = vmatpush1.xpose.msra.mxu0 0.0
    %606 = vmatprep.subr.mxu0 0.0
    %607 = vmatpush1.xpose.msra.mxu0 0.0
    %608 = vmatprep.subr.mxu0 0.0
    %609 = vmatpush1.xpose.msra.mxu0 0.0
    %610 = vmatprep.subr.mxu0 0.0
    %611 = vmatpush1.xpose.msra.mxu0 0.0
    %612 = vmatprep.subr.mxu0 0.0
    %613 = vmatpush1.xpose.msra.mxu0 %v580
    %614 = vmatprep.subr.mxu0 0.0
    %615 = vmatpush2.xpose.msra.mxu0 0.0
    %616 = vmatprep.subr.mxu0 0.0
    %617 = vmatpush2.xpose.msra.mxu0 0.0
    %618 = vmatprep.subr.mxu0 0.0
    %619 = vmatpush2.xpose.msra.mxu0 0.0
    %620 = vmatprep.subr.mxu0 0.0
    %621 = vmatpush2.xpose.msra.mxu0 0.0
    %622 = vmatprep.subr.mxu0 0.0
    %623 = vmatpush2.xpose.msra.mxu0 0.0
    %624 = vmatprep.subr.mxu0 0.0
    %625 = vmatpush2.xpose.msra.mxu0 0.0
    %626 = vmatprep.subr.mxu0 0.0
    %627 = vmatpush2.xpose.msra.mxu0 0.0
    %628 = vmatprep.subr.mxu0 0.0
    %629 = vmatpush2.xpose.msra.mxu0 0.0
    %630 = vmatprep.subr.mxu0 0.0
    %631 = vmatpush2.xpose.msra.mxu0 0.0
    %632 = vmatprep.subr.mxu0 0.0
    %633 = vmatpush2.xpose.msra.mxu0 0.0
    %634 = vmatprep.subr.mxu0 0.0
    %635 = vmatpush2.xpose.msra.mxu0 0.0
    %636 = vmatprep.subr.mxu0 0.0
    %637 = vmatpush2.xpose.msra.mxu0 0.0
    %638 = vmatprep.subr.mxu0 0.0
    %639 = vmatpush2.xpose.msra.mxu0 0.0
    %640 = vmatprep.subr.mxu0 0.0
    %641 = vmatpush2.xpose.msra.mxu0 0.0
    %642 = vmatprep.subr.mxu0 0.0
    %643 = vmatpush2.xpose.msra.mxu0 0.0
    %644 = vmatprep.subr.mxu0 0.0
    %645 = vmatpush2.xpose.msra.mxu0 0.0
    %646 = vmatprep.mubr.f32.mxu0 0.0
    %647 = vmatmul.mubr.f32.gmra.mxu0 %v578
    %v648 = vpop.f32.mrf.mxu0
    %v649 = vadd.f32 0.0, %v648
    %v650 = vpop.f32.mrf.mxu0
    %651 = vdwg.mxu0
    %652 = vrot.lane.b32.xlu0 %v207, 96
    %v653 = vpop.permute.xlu0 %652
    %v655 = vsel %vm345, %v319, 0
    %v657 = vsel %vm345, %v653, 0
    %659 = vmatprep.subr.mxu0 0.0
    %660 = vmatpush1.xpose.msra.mxu0 0.0
    %661 = vmatprep.subr.mxu0 0.0
    %662 = vmatpush1.xpose.msra.mxu0 0.0
    %663 = vmatprep.subr.mxu0 0.0
    %664 = vmatpush1.xpose.msra.mxu0 0.0
    %665 = vmatprep.subr.mxu0 0.0
    %666 = vmatpush1.xpose.msra.mxu0 0.0
    %667 = vmatprep.subr.mxu0 0.0
    %668 = vmatpush1.xpose.msra.mxu0 0.0
    %669 = vmatprep.subr.mxu0 0.0
    %670 = vmatpush1.xpose.msra.mxu0 0.0
    %671 = vmatprep.subr.mxu0 0.0
    %672 = vmatpush1.xpose.msra.mxu0 0.0
    %673 = vmatprep.subr.mxu0 0.0
    %674 = vmatpush1.xpose.msra.mxu0 0.0
    %675 = vmatprep.subr.mxu0 0.0
    %676 = vmatpush1.xpose.msra.mxu0 0.0
    %677 = vmatprep.subr.mxu0 0.0
    %678 = vmatpush1.xpose.msra.mxu0 0.0
    %679 = vmatprep.subr.mxu0 0.0
    %680 = vmatpush1.xpose.msra.mxu0 0.0
    %681 = vmatprep.subr.mxu0 0.0
    %682 = vmatpush1.xpose.msra.mxu0 0.0
    %683 = vmatprep.subr.mxu0 0.0
    %684 = vmatpush1.xpose.msra.mxu0 0.0
    %685 = vmatprep.subr.mxu0 0.0
    %686 = vmatpush1.xpose.msra.mxu0 0.0
    %687 = vmatprep.subr.mxu0 0.0
    %688 = vmatpush1.xpose.msra.mxu0 0.0
    %689 = vmatprep.subr.mxu0 0.0
    %690 = vmatpush1.xpose.msra.mxu0 %v657
    %691 = vmatprep.subr.mxu0 0.0
    %692 = vmatpush2.xpose.msra.mxu0 0.0
    %693 = vmatprep.subr.mxu0 0.0
    %694 = vmatpush2.xpose.msra.mxu0 0.0
    %695 = vmatprep.subr.mxu0 0.0
    %696 = vmatpush2.xpose.msra.mxu0 0.0
    %697 = vmatprep.subr.mxu0 0.0
    %698 = vmatpush2.xpose.msra.mxu0 0.0
    %699 = vmatprep.subr.mxu0 0.0
    %700 = vmatpush2.xpose.msra.mxu0 0.0
    %701 = vmatprep.subr.mxu0 0.0
    %702 = vmatpush2.xpose.msra.mxu0 0.0
    %703 = vmatprep.subr.mxu0 0.0
    %704 = vmatpush2.xpose.msra.mxu0 0.0
    %705 = vmatprep.subr.mxu0 0.0
    %706 = vmatpush2.xpose.msra.mxu0 0.0
    %707 = vmatprep.subr.mxu0 0.0
    %708 = vmatpush2.xpose.msra.mxu0 0.0
    %709 = vmatprep.subr.mxu0 0.0
    %710 = vmatpush2.xpose.msra.mxu0 0.0
    %711 = vmatprep.subr.mxu0 0.0
    %712 = vmatpush2.xpose.msra.mxu0 0.0
    %713 = vmatprep.subr.mxu0 0.0
    %714 = vmatpush2.xpose.msra.mxu0 0.0
    %715 = vmatprep.subr.mxu0 0.0
    %716 = vmatpush2.xpose.msra.mxu0 0.0
    %717 = vmatprep.subr.mxu0 0.0
    %718 = vmatpush2.xpose.msra.mxu0 0.0
    %719 = vmatprep.subr.mxu0 0.0
    %720 = vmatpush2.xpose.msra.mxu0 0.0
    %721 = vmatprep.subr.mxu0 0.0
    %722 = vmatpush2.xpose.msra.mxu0 0.0
    %723 = vmatprep.mubr.f32.mxu0 0.0
    %724 = vmatmul.mubr.f32.gmra.mxu0 %v655
    %v725 = vpop.f32.mrf.mxu0
    %v726 = vadd.f32 0.0, %v725
    %v727 = vpop.f32.mrf.mxu0
    %728 = vdwg.mxu0
    %729 = vrot.lane.b32.xlu0 %v307, 96
    %v730 = vpop.permute.xlu0 %729
    %v732 = vsel %vm345, %v320, 0
    %v734 = vsel %vm345, %v730, 0
    %736 = vmatprep.subr.mxu0 0.0
    %737 = vmatpush1.xpose.msra.mxu0 0.0
    %738 = vmatprep.subr.mxu0 0.0
    %739 = vmatpush1.xpose.msra.mxu0 0.0
    %740 = vmatprep.subr.mxu0 0.0
    %741 = vmatpush1.xpose.msra.mxu0 0.0
    %742 = vmatprep.subr.mxu0 0.0
    %743 = vmatpush1.xpose.msra.mxu0 0.0
    %744 = vmatprep.subr.mxu0 0.0
    %745 = vmatpush1.xpose.msra.mxu0 0.0
    %746 = vmatprep.subr.mxu0 0.0
    %747 = vmatpush1.xpose.msra.mxu0 0.0
    %748 = vmatprep.subr.mxu0 0.0
    %749 = vmatpush1.xpose.msra.mxu0 0.0
    %750 = vmatprep.subr.mxu0 0.0
    %751 = vmatpush1.xpose.msra.mxu0 0.0
    %752 = vmatprep.subr.mxu0 0.0
    %753 = vmatpush1.xpose.msra.mxu0 0.0
    %754 = vmatprep.subr.mxu0 0.0
    %755 = vmatpush1.xpose.msra.mxu0 0.0
    %756 = vmatprep.subr.mxu0 0.0
    %757 = vmatpush1.xpose.msra.mxu0 0.0
    %758 = vmatprep.subr.mxu0 0.0
    %759 = vmatpush1.xpose.msra.mxu0 0.0
    %760 = vmatprep.subr.mxu0 0.0
    %761 = vmatpush1.xpose.msra.mxu0 0.0
    %762 = vmatprep.subr.mxu0 0.0
    %763 = vmatpush1.xpose.msra.mxu0 0.0
    %764 = vmatprep.subr.mxu0 0.0
    %765 = vmatpush1.xpose.msra.mxu0 0.0
    %766 = vmatprep.subr.mxu0 0.0
    %767 = vmatpush1.xpose.msra.mxu0 %v734
    %768 = vmatprep.subr.mxu0 0.0
    %769 = vmatpush2.xpose.msra.mxu0 0.0
    %770 = vmatprep.subr.mxu0 0.0
    %771 = vmatpush2.xpose.msra.mxu0 0.0
    %772 = vmatprep.subr.mxu0 0.0
    %773 = vmatpush2.xpose.msra.mxu0 0.0
    %774 = vmatprep.subr.mxu0 0.0
    %775 = vmatpush2.xpose.msra.mxu0 0.0
    %776 = vmatprep.subr.mxu0 0.0
    %777 = vmatpush2.xpose.msra.mxu0 0.0
    %778 = vmatprep.subr.mxu0 0.0
    %779 = vmatpush2.xpose.msra.mxu0 0.0
    %780 = vmatprep.subr.mxu0 0.0
    %781 = vmatpush2.xpose.msra.mxu0 0.0
    %782 = vmatprep.subr.mxu0 0.0
    %783 = vmatpush2.xpose.msra.mxu0 0.0
    %784 = vmatprep.subr.mxu0 0.0
    %785 = vmatpush2.xpose.msra.mxu0 0.0
    %786 = vmatprep.subr.mxu0 0.0
    %787 = vmatpush2.xpose.msra.mxu0 0.0
    %788 = vmatprep.subr.mxu0 0.0
    %789 = vmatpush2.xpose.msra.mxu0 0.0
    %790 = vmatprep.subr.mxu0 0.0
    %791 = vmatpush2.xpose.msra.mxu0 0.0
    %792 = vmatprep.subr.mxu0 0.0
    %793 = vmatpush2.xpose.msra.mxu0 0.0
    %794 = vmatprep.subr.mxu0 0.0
    %795 = vmatpush2.xpose.msra.mxu0 0.0
    %796 = vmatprep.subr.mxu0 0.0
    %797 = vmatpush2.xpose.msra.mxu0 0.0
    %798 = vmatprep.subr.mxu0 0.0
    %799 = vmatpush2.xpose.msra.mxu0 0.0
    %800 = vmatprep.mubr.f32.mxu0 0.0
    %801 = vmatmul.mubr.f32.gmra.mxu0 %v732
    %v802 = vpop.f32.mrf.mxu0
    %v803 = vadd.f32 0.0, %v802
    %v804 = vpop.f32.mrf.mxu0
    %805 = vdwg.mxu0
    %806 = vrot.lane.b32.xlu0 %v310, 96
    %v807 = vpop.permute.xlu0 %806
    %v809 = vsel %vm345, %v321, 0
    %v811 = vsel %vm345, %v807, 0
    %813 = vmatprep.subr.mxu0 0.0
    %814 = vmatpush1.xpose.msra.mxu0 0.0
    %815 = vmatprep.subr.mxu0 0.0
    %816 = vmatpush1.xpose.msra.mxu0 0.0
    %817 = vmatprep.subr.mxu0 0.0
    %818 = vmatpush1.xpose.msra.mxu0 0.0
    %819 = vmatprep.subr.mxu0 0.0
    %820 = vmatpush1.xpose.msra.mxu0 0.0
    %821 = vmatprep.subr.mxu0 0.0
    %822 = vmatpush1.xpose.msra.mxu0 0.0
    %823 = vmatprep.subr.mxu0 0.0
    %824 = vmatpush1.xpose.msra.mxu0 0.0
    %825 = vmatprep.subr.mxu0 0.0
    %826 = vmatpush1.xpose.msra.mxu0 0.0
    %827 = vmatprep.subr.mxu0 0.0
    %828 = vmatpush1.xpose.msra.mxu0 0.0
    %829 = vmatprep.subr.mxu0 0.0
    %830 = vmatpush1.xpose.msra.mxu0 0.0
    %831 = vmatprep.subr.mxu0 0.0
    %832 = vmatpush1.xpose.msra.mxu0 0.0
    %833 = vmatprep.subr.mxu0 0.0
    %834 = vmatpush1.xpose.msra.mxu0 0.0
    %835 = vmatprep.subr.mxu0 0.0
    %836 = vmatpush1.xpose.msra.mxu0 0.0
    %837 = vmatprep.subr.mxu0 0.0
    %838 = vmatpush1.xpose.msra.mxu0 0.0
    %839 = vmatprep.subr.mxu0 0.0
    %840 = vmatpush1.xpose.msra.mxu0 0.0
    %841 = vmatprep.subr.mxu0 0.0
    %842 = vmatpush1.xpose.msra.mxu0 0.0
    %843 = vmatprep.subr.mxu0 0.0
    %844 = vmatpush1.xpose.msra.mxu0 %v811
    %845 = vmatprep.subr.mxu0 0.0
    %846 = vmatpush2.xpose.msra.mxu0 0.0
    %847 = vmatprep.subr.mxu0 0.0
    %848 = vmatpush2.xpose.msra.mxu0 0.0
    %849 = vmatprep.subr.mxu0 0.0
    %850 = vmatpush2.xpose.msra.mxu0 0.0
    %851 = vmatprep.subr.mxu0 0.0
    %852 = vmatpush2.xpose.msra.mxu0 0.0
    %853 = vmatprep.subr.mxu0 0.0
    %854 = vmatpush2.xpose.msra.mxu0 0.0
    %855 = vmatprep.subr.mxu0 0.0
    %856 = vmatpush2.xpose.msra.mxu0 0.0
    %857 = vmatprep.subr.mxu0 0.0
    %858 = vmatpush2.xpose.msra.mxu0 0.0
    %859 = vmatprep.subr.mxu0 0.0
    %860 = vmatpush2.xpose.msra.mxu0 0.0
    %861 = vmatprep.subr.mxu0 0.0
    %862 = vmatpush2.xpose.msra.mxu0 0.0
    %863 = vmatprep.subr.mxu0 0.0
    %864 = vmatpush2.xpose.msra.mxu0 0.0
    %865 = vmatprep.subr.mxu0 0.0
    %866 = vmatpush2.xpose.msra.mxu0 0.0
    %867 = vmatprep.subr.mxu0 0.0
    %868 = vmatpush2.xpose.msra.mxu0 0.0
    %869 = vmatprep.subr.mxu0 0.0
    %870 = vmatpush2.xpose.msra.mxu0 0.0
    %871 = vmatprep.subr.mxu0 0.0
    %872 = vmatpush2.xpose.msra.mxu0 0.0
    %873 = vmatprep.subr.mxu0 0.0
    %874 = vmatpush2.xpose.msra.mxu0 0.0
    %875 = vmatprep.subr.mxu0 0.0
    %876 = vmatpush2.xpose.msra.mxu0 0.0
    %877 = vmatprep.mubr.f32.mxu0 0.0
    %878 = vmatmul.mubr.f32.gmra.mxu0 %v809
    %v879 = vpop.f32.mrf.mxu0
    %v880 = vadd.f32 0.0, %v879
    %v881 = vpop.f32.mrf.mxu0
    %882 = vdwg.mxu0
    %883 = vrot.lane.b32.xlu0 %v313, 96
    %v884 = vpop.permute.xlu0 %883
    %v886 = vsel %vm345, %v322, 0
    %v888 = vsel %vm345, %v884, 0
    %890 = vmatprep.subr.mxu0 0.0
    %891 = vmatpush1.xpose.msra.mxu0 0.0
    %892 = vmatprep.subr.mxu0 0.0
    %893 = vmatpush1.xpose.msra.mxu0 0.0
    %894 = vmatprep.subr.mxu0 0.0
    %895 = vmatpush1.xpose.msra.mxu0 0.0
    %896 = vmatprep.subr.mxu0 0.0
    %897 = vmatpush1.xpose.msra.mxu0 0.0
    %898 = vmatprep.subr.mxu0 0.0
    %899 = vmatpush1.xpose.msra.mxu0 0.0
    %900 = vmatprep.subr.mxu0 0.0
    %901 = vmatpush1.xpose.msra.mxu0 0.0
    %902 = vmatprep.subr.mxu0 0.0
    %903 = vmatpush1.xpose.msra.mxu0 0.0
    %904 = vmatprep.subr.mxu0 0.0
    %905 = vmatpush1.xpose.msra.mxu0 0.0
    %906 = vmatprep.subr.mxu0 0.0
    %907 = vmatpush1.xpose.msra.mxu0 0.0
    %908 = vmatprep.subr.mxu0 0.0
    %909 = vmatpush1.xpose.msra.mxu0 0.0
    %910 = vmatprep.subr.mxu0 0.0
    %911 = vmatpush1.xpose.msra.mxu0 0.0
    %912 = vmatprep.subr.mxu0 0.0
    %913 = vmatpush1.xpose.msra.mxu0 0.0
    %914 = vmatprep.subr.mxu0 0.0
    %915 = vmatpush1.xpose.msra.mxu0 0.0
    %916 = vmatprep.subr.mxu0 0.0
    %917 = vmatpush1.xpose.msra.mxu0 0.0
    %918 = vmatprep.subr.mxu0 0.0
    %919 = vmatpush1.xpose.msra.mxu0 0.0
    %920 = vmatprep.subr.mxu0 0.0
    %921 = vmatpush1.xpose.msra.mxu0 %v888
    %922 = vmatprep.subr.mxu0 0.0
    %923 = vmatpush2.xpose.msra.mxu0 0.0
    %924 = vmatprep.subr.mxu0 0.0
    %925 = vmatpush2.xpose.msra.mxu0 0.0
    %926 = vmatprep.subr.mxu0 0.0
    %927 = vmatpush2.xpose.msra.mxu0 0.0
    %928 = vmatprep.subr.mxu0 0.0
    %929 = vmatpush2.xpose.msra.mxu0 0.0
    %930 = vmatprep.subr.mxu0 0.0
    %931 = vmatpush2.xpose.msra.mxu0 0.0
    %932 = vmatprep.subr.mxu0 0.0
    %933 = vmatpush2.xpose.msra.mxu0 0.0
    %934 = vmatprep.subr.mxu0 0.0
    %935 = vmatpush2.xpose.msra.mxu0 0.0
    %936 = vmatprep.subr.mxu0 0.0
    %937 = vmatpush2.xpose.msra.mxu0 0.0
    %938 = vmatprep.subr.mxu0 0.0
    %939 = vmatpush2.xpose.msra.mxu0 0.0
    %940 = vmatprep.subr.mxu0 0.0
    %941 = vmatpush2.xpose.msra.mxu0 0.0
    %942 = vmatprep.subr.mxu0 0.0
    %943 = vmatpush2.xpose.msra.mxu0 0.0
    %944 = vmatprep.subr.mxu0 0.0
    %945 = vmatpush2.xpose.msra.mxu0 0.0
    %946 = vmatprep.subr.mxu0 0.0
    %947 = vmatpush2.xpose.msra.mxu0 0.0
    %948 = vmatprep.subr.mxu0 0.0
    %949 = vmatpush2.xpose.msra.mxu0 0.0
    %950 = vmatprep.subr.mxu0 0.0
    %951 = vmatpush2.xpose.msra.mxu0 0.0
    %952 = vmatprep.subr.mxu0 0.0
    %953 = vmatpush2.xpose.msra.mxu0 0.0
    %954 = vmatprep.mubr.f32.mxu0 0.0
    %955 = vmatmul.mubr.f32.gmra.mxu0 %v886
    %v956 = vpop.f32.mrf.mxu0
    %v957 = vadd.f32 0.0, %v956
    %v958 = vpop.f32.mrf.mxu0
    %959 = vdwg.mxu0
    %v960 = vsel %vm345, %v418, -inf
    %961 = vmax.xlane.f32.xlu0 %v960
    %v962 = vpop.xlane.xlu0 %961
    %v963 = vsel %vm345, %v495, -inf
    %964 = vmax.xlane.f32.xlu0 %v963
    %v965 = vpop.xlane.xlu0 %964
    %v966 = vsel %vm345, %v572, -inf
    %967 = vmax.xlane.f32.xlu0 %v966
    %v968 = vpop.xlane.xlu0 %967
    %v969 = vsel %vm345, %v649, -inf
    %970 = vmax.xlane.f32.xlu0 %v969
    %v971 = vpop.xlane.xlu0 %970
    %v972 = vsel %vm345, %v726, -inf
    %973 = vmax.xlane.f32.xlu0 %v972
    %v974 = vpop.xlane.xlu0 %973
    %v975 = vsel %vm345, %v803, -inf
    %976 = vmax.xlane.f32.xlu0 %v975
    %v977 = vpop.xlane.xlu0 %976
    %v978 = vsel %vm345, %v880, -inf
    %979 = vmax.xlane.f32.xlu0 %v978
    %v980 = vpop.xlane.xlu0 %979
    %v981 = vsel %vm345, %v957, -inf
    %982 = vmax.xlane.f32.xlu0 %v981
    %v983 = vpop.xlane.xlu0 %982
    %v984 = vsub.f32 %v418, %v962
    %v985 = vsub.f32 %v495, %v965
    %v986 = vsub.f32 %v572, %v968
    %v987 = vsub.f32 %v649, %v971
    %v988 = vsub.f32 %v726, %v974
    %v989 = vsub.f32 %v803, %v977
    %v990 = vsub.f32 %v880, %v980
    %v991 = vsub.f32 %v957, %v983
    %v992 = vmul.f32 %v984, 1.442695
    %v993 = vpow.pop %v992
    %v994 = vmul.f32 %v985, 1.442695
    %v995 = vpow.pop %v994
    %v996 = vmul.f32 %v986, 1.442695
    %v997 = vpow.pop %v996
    %v998 = vmul.f32 %v987, 1.442695
    %v999 = vpow.pop %v998
    %v1000 = vmul.f32 %v988, 1.442695
    %v1001 = vpow.pop %v1000
    %v1002 = vmul.f32 %v989, 1.442695
    %v1003 = vpow.pop %v1002
    %v1004 = vmul.f32 %v990, 1.442695
    %v1005 = vpow.pop %v1004
    %v1006 = vmul.f32 %v991, 1.442695
    %v1007 = vpow.pop %v1006
    %v1008 = vsel %vm345, %v993, 0.0
    %1009 = vadd.xlane.f32.xlu0 %v1008
    %v1010 = vpop.xlane.xlu0 %1009
    %v1011 = vsel %vm345, %v995, 0.0
    %1012 = vadd.xlane.f32.xlu0 %v1011
    %v1013 = vpop.xlane.xlu0 %1012
    %v1014 = vsel %vm345, %v997, 0.0
    %1015 = vadd.xlane.f32.xlu0 %v1014
    %v1016 = vpop.xlane.xlu0 %1015
    %v1017 = vsel %vm345, %v999, 0.0
    %1018 = vadd.xlane.f32.xlu0 %v1017
    %v1019 = vpop.xlane.xlu0 %1018
    %v1020 = vsel %vm345, %v1001, 0.0
    %1021 = vadd.xlane.f32.xlu0 %v1020
    %v1022 = vpop.xlane.xlu0 %1021
    %v1023 = vsel %vm345, %v1003, 0.0
    %1024 = vadd.xlane.f32.xlu0 %v1023
    %v1025 = vpop.xlane.xlu0 %1024
    %v1026 = vsel %vm345, %v1005, 0.0
    %1027 = vadd.xlane.f32.xlu0 %v1026
    %v1028 = vpop.xlane.xlu0 %1027
    %v1029 = vsel %vm345, %v1007, 0.0
    %1030 = vadd.xlane.f32.xlu0 %v1029
    %v1031 = vpop.xlane.xlu0 %1030
    %v1032 = vrcp.pop %v1010
    %v1033 = vmul.f32 %v993, %v1032
    %v1034 = vrcp.pop %v1013
    %v1035 = vmul.f32 %v995, %v1034
    %v1036 = vrcp.pop %v1016
    %v1037 = vmul.f32 %v997, %v1036
    %v1038 = vrcp.pop %v1019
    %v1039 = vmul.f32 %v999, %v1038
    %v1040 = vrcp.pop %v1022
    %v1041 = vmul.f32 %v1001, %v1040
    %v1042 = vrcp.pop %v1025
    %v1043 = vmul.f32 %v1003, %v1042
    %v1044 = vrcp.pop %v1028
    %v1045 = vmul.f32 %v1005, %v1044
    %v1046 = vrcp.pop %v1031
    %v1047 = vmul.f32 %v1007, %v1046
    %v1049 = vsel %vm345, %v1033, 0
    %1051 = vmatprep.subr.mxu0 0.0
    %1052 = vmatpush1.msra.mxu0 0.0
    %1053 = vmatprep.subr.mxu0 0.0
    %1054 = vmatpush1.msra.mxu0 0.0
    %1055 = vmatprep.subr.mxu0 0.0
    %1056 = vmatpush1.msra.mxu0 0.0
    %1057 = vmatprep.subr.mxu0 0.0
    %1058 = vmatpush1.msra.mxu0 0.0
    %1059 = vmatprep.subr.mxu0 0.0
    %1060 = vmatpush1.msra.mxu0 0.0
    %1061 = vmatprep.subr.mxu0 0.0
    %1062 = vmatpush1.msra.mxu0 0.0
    %1063 = vmatprep.subr.mxu0 0.0
    %1064 = vmatpush1.msra.mxu0 0.0
    %1065 = vmatprep.subr.mxu0 0.0
    %1066 = vmatpush1.msra.mxu0 0.0
    %1067 = vmatprep.subr.mxu0 0.0
    %1068 = vmatpush1.msra.mxu0 0.0
    %1069 = vmatprep.subr.mxu0 0.0
    %1070 = vmatpush1.msra.mxu0 0.0
    %1071 = vmatprep.subr.mxu0 0.0
    %1072 = vmatpush1.msra.mxu0 0.0
    %1073 = vmatprep.subr.mxu0 0.0
    %1074 = vmatpush1.msra.mxu0 0.0
    %1075 = vmatprep.subr.mxu0 0.0
    %1076 = vmatpush1.msra.mxu0 0.0
    %1077 = vmatprep.subr.mxu0 0.0
    %1078 = vmatpush1.msra.mxu0 0.0
    %1079 = vmatprep.subr.mxu0 0.0
    %1080 = vmatpush1.msra.mxu0 0.0
    %1081 = vmatprep.subr.mxu0 0.0
    %1082 = vmatpush1.msra.mxu0 %v287
    %1083 = vmatprep.subr.mxu0 0.0
    %1084 = vmatpush2.msra.mxu0 0.0
    %1085 = vmatprep.subr.mxu0 0.0
    %1086 = vmatpush2.msra.mxu0 0.0
    %1087 = vmatprep.subr.mxu0 0.0
    %1088 = vmatpush2.msra.mxu0 0.0
    %1089 = vmatprep.subr.mxu0 0.0
    %1090 = vmatpush2.msra.mxu0 0.0
    %1091 = vmatprep.subr.mxu0 0.0
    %1092 = vmatpush2.msra.mxu0 0.0
    %1093 = vmatprep.subr.mxu0 0.0
    %1094 = vmatpush2.msra.mxu0 0.0
    %1095 = vmatprep.subr.mxu0 0.0
    %1096 = vmatpush2.msra.mxu0 0.0
    %1097 = vmatprep.subr.mxu0 0.0
    %1098 = vmatpush2.msra.mxu0 0.0
    %1099 = vmatprep.subr.mxu0 0.0
    %1100 = vmatpush2.msra.mxu0 0.0
    %1101 = vmatprep.subr.mxu0 0.0
    %1102 = vmatpush2.msra.mxu0 0.0
    %1103 = vmatprep.subr.mxu0 0.0
    %1104 = vmatpush2.msra.mxu0 0.0
    %1105 = vmatprep.subr.mxu0 0.0
    %1106 = vmatpush2.msra.mxu0 0.0
    %1107 = vmatprep.subr.mxu0 0.0
    %1108 = vmatpush2.msra.mxu0 0.0
    %1109 = vmatprep.subr.mxu0 0.0
    %1110 = vmatpush2.msra.mxu0 0.0
    %1111 = vmatprep.subr.mxu0 0.0
    %1112 = vmatpush2.msra.mxu0 0.0
    %1113 = vmatprep.subr.mxu0 0.0
    %1114 = vmatpush2.msra.mxu0 0.0
    %1115 = vmatprep.mubr.f32.mxu0 0.0
    %1116 = vmatmul.mubr.f32.gmra.mxu0 %v1049
    %v1117 = vpop.f32.mrf.mxu0
    %v1118 = vadd.f32 0.0, %v1117
    %v1119 = vpop.f32.mrf.mxu0
    %1120 = vdwg.mxu0
    %v1122 = vsel %vm345, %v1035, 0
    %1124 = vmatprep.subr.mxu0 0.0
    %1125 = vmatpush1.msra.mxu0 0.0
    %1126 = vmatprep.subr.mxu0 0.0
    %1127 = vmatpush1.msra.mxu0 0.0
    %1128 = vmatprep.subr.mxu0 0.0
    %1129 = vmatpush1.msra.mxu0 0.0
    %1130 = vmatprep.subr.mxu0 0.0
    %1131 = vmatpush1.msra.mxu0 0.0
    %1132 = vmatprep.subr.mxu0 0.0
    %1133 = vmatpush1.msra.mxu0 0.0
    %1134 = vmatprep.subr.mxu0 0.0
    %1135 = vmatpush1.msra.mxu0 0.0
    %1136 = vmatprep.subr.mxu0 0.0
    %1137 = vmatpush1.msra.mxu0 0.0
    %1138 = vmatprep.subr.mxu0 0.0
    %1139 = vmatpush1.msra.mxu0 0.0
    %1140 = vmatprep.subr.mxu0 0.0
    %1141 = vmatpush1.msra.mxu0 0.0
    %1142 = vmatprep.subr.mxu0 0.0
    %1143 = vmatpush1.msra.mxu0 0.0
    %1144 = vmatprep.subr.mxu0 0.0
    %1145 = vmatpush1.msra.mxu0 0.0
    %1146 = vmatprep.subr.mxu0 0.0
    %1147 = vmatpush1.msra.mxu0 0.0
    %1148 = vmatprep.subr.mxu0 0.0
    %1149 = vmatpush1.msra.mxu0 0.0
    %1150 = vmatprep.subr.mxu0 0.0
    %1151 = vmatpush1.msra.mxu0 0.0
    %1152 = vmatprep.subr.mxu0 0.0
    %1153 = vmatpush1.msra.mxu0 0.0
    %1154 = vmatprep.subr.mxu0 0.0
    %1155 = vmatpush1.msra.mxu0 %v325
    %1156 = vmatprep.subr.mxu0 0.0
    %1157 = vmatpush2.msra.mxu0 0.0
    %1158 = vmatprep.subr.mxu0 0.0
    %1159 = vmatpush2.msra.mxu0 0.0
    %1160 = vmatprep.subr.mxu0 0.0
    %1161 = vmatpush2.msra.mxu0 0.0
    %1162 = vmatprep.subr.mxu0 0.0
    %1163 = vmatpush2.msra.mxu0 0.0
    %1164 = vmatprep.subr.mxu0 0.0
    %1165 = vmatpush2.msra.mxu0 0.0
    %1166 = vmatprep.subr.mxu0 0.0
    %1167 = vmatpush2.msra.mxu0 0.0
    %1168 = vmatprep.subr.mxu0 0.0
    %1169 = vmatpush2.msra.mxu0 0.0
    %1170 = vmatprep.subr.mxu0 0.0
    %1171 = vmatpush2.msra.mxu0 0.0
    %1172 = vmatprep.subr.mxu0 0.0
    %1173 = vmatpush2.msra.mxu0 0.0
    %1174 = vmatprep.subr.mxu0 0.0
    %1175 = vmatpush2.msra.mxu0 0.0
    %1176 = vmatprep.subr.mxu0 0.0
    %1177 = vmatpush2.msra.mxu0 0.0
    %1178 = vmatprep.subr.mxu0 0.0
    %1179 = vmatpush2.msra.mxu0 0.0
    %1180 = vmatprep.subr.mxu0 0.0
    %1181 = vmatpush2.msra.mxu0 0.0
    %1182 = vmatprep.subr.mxu0 0.0
    %1183 = vmatpush2.msra.mxu0 0.0
    %1184 = vmatprep.subr.mxu0 0.0
    %1185 = vmatpush2.msra.mxu0 0.0
    %1186 = vmatprep.subr.mxu0 0.0
    %1187 = vmatpush2.msra.mxu0 0.0
    %1188 = vmatprep.mubr.f32.mxu0 0.0
    %1189 = vmatmul.mubr.f32.gmra.mxu0 %v1122
    %v1190 = vpop.f32.mrf.mxu0
    %v1191 = vadd.f32 0.0, %v1190
    %v1192 = vpop.f32.mrf.mxu0
    %1193 = vdwg.mxu0
    %v1195 = vsel %vm345, %v1037, 0
    %1197 = vmatprep.subr.mxu0 0.0
    %1198 = vmatpush1.msra.mxu0 0.0
    %1199 = vmatprep.subr.mxu0 0.0
    %1200 = vmatpush1.msra.mxu0 0.0
    %1201 = vmatprep.subr.mxu0 0.0
    %1202 = vmatpush1.msra.mxu0 0.0
    %1203 = vmatprep.subr.mxu0 0.0
    %1204 = vmatpush1.msra.mxu0 0.0
    %1205 = vmatprep.subr.mxu0 0.0
    %1206 = vmatpush1.msra.mxu0 0.0
    %1207 = vmatprep.subr.mxu0 0.0
    %1208 = vmatpush1.msra.mxu0 0.0
    %1209 = vmatprep.subr.mxu0 0.0
    %1210 = vmatpush1.msra.mxu0 0.0
    %1211 = vmatprep.subr.mxu0 0.0
    %1212 = vmatpush1.msra.mxu0 0.0
    %1213 = vmatprep.subr.mxu0 0.0
    %1214 = vmatpush1.msra.mxu0 0.0
    %1215 = vmatprep.subr.mxu0 0.0
    %1216 = vmatpush1.msra.mxu0 0.0
    %1217 = vmatprep.subr.mxu0 0.0
    %1218 = vmatpush1.msra.mxu0 0.0
    %1219 = vmatprep.subr.mxu0 0.0
    %1220 = vmatpush1.msra.mxu0 0.0
    %1221 = vmatprep.subr.mxu0 0.0
    %1222 = vmatpush1.msra.mxu0 0.0
    %1223 = vmatprep.subr.mxu0 0.0
    %1224 = vmatpush1.msra.mxu0 0.0
    %1225 = vmatprep.subr.mxu0 0.0
    %1226 = vmatpush1.msra.mxu0 0.0
    %1227 = vmatprep.subr.mxu0 0.0
    %1228 = vmatpush1.msra.mxu0 %v328
    %1229 = vmatprep.subr.mxu0 0.0
    %1230 = vmatpush2.msra.mxu0 0.0
    %1231 = vmatprep.subr.mxu0 0.0
    %1232 = vmatpush2.msra.mxu0 0.0
    %1233 = vmatprep.subr.mxu0 0.0
    %1234 = vmatpush2.msra.mxu0 0.0
    %1235 = vmatprep.subr.mxu0 0.0
    %1236 = vmatpush2.msra.mxu0 0.0
    %1237 = vmatprep.subr.mxu0 0.0
    %1238 = vmatpush2.msra.mxu0 0.0
    %1239 = vmatprep.subr.mxu0 0.0
    %1240 = vmatpush2.msra.mxu0 0.0
    %1241 = vmatprep.subr.mxu0 0.0
    %1242 = vmatpush2.msra.mxu0 0.0
    %1243 = vmatprep.subr.mxu0 0.0
    %1244 = vmatpush2.msra.mxu0 0.0
    %1245 = vmatprep.subr.mxu0 0.0
    %1246 = vmatpush2.msra.mxu0 0.0
    %1247 = vmatprep.subr.mxu0 0.0
    %1248 = vmatpush2.msra.mxu0 0.0
    %1249 = vmatprep.subr.mxu0 0.0
    %1250 = vmatpush2.msra.mxu0 0.0
    %1251 = vmatprep.subr.mxu0 0.0
    %1252 = vmatpush2.msra.mxu0 0.0
    %1253 = vmatprep.subr.mxu0 0.0
    %1254 = vmatpush2.msra.mxu0 0.0
    %1255 = vmatprep.subr.mxu0 0.0
    %1256 = vmatpush2.msra.mxu0 0.0
    %1257 = vmatprep.subr.mxu0 0.0
    %1258 = vmatpush2.msra.mxu0 0.0
    %1259 = vmatprep.subr.mxu0 0.0
    %1260 = vmatpush2.msra.mxu0 0.0
    %1261 = vmatprep.mubr.f32.mxu0 0.0
    %1262 = vmatmul.mubr.f32.gmra.mxu0 %v1195
    %v1263 = vpop.f32.mrf.mxu0
    %v1264 = vadd.f32 0.0, %v1263
    %v1265 = vpop.f32.mrf.mxu0
    %1266 = vdwg.mxu0
    %v1268 = vsel %vm345, %v1039, 0
    %1270 = vmatprep.subr.mxu0 0.0
    %1271 = vmatpush1.msra.mxu0 0.0
    %1272 = vmatprep.subr.mxu0 0.0
    %1273 = vmatpush1.msra.mxu0 0.0
    %1274 = vmatprep.subr.mxu0 0.0
    %1275 = vmatpush1.msra.mxu0 0.0
    %1276 = vmatprep.subr.mxu0 0.0
    %1277 = vmatpush1.msra.mxu0 0.0
    %1278 = vmatprep.subr.mxu0 0.0
    %1279 = vmatpush1.msra.mxu0 0.0
    %1280 = vmatprep.subr.mxu0 0.0
    %1281 = vmatpush1.msra.mxu0 0.0
    %1282 = vmatprep.subr.mxu0 0.0
    %1283 = vmatpush1.msra.mxu0 0.0
    %1284 = vmatprep.subr.mxu0 0.0
    %1285 = vmatpush1.msra.mxu0 0.0
    %1286 = vmatprep.subr.mxu0 0.0
    %1287 = vmatpush1.msra.mxu0 0.0
    %1288 = vmatprep.subr.mxu0 0.0
    %1289 = vmatpush1.msra.mxu0 0.0
    %1290 = vmatprep.subr.mxu0 0.0
    %1291 = vmatpush1.msra.mxu0 0.0
    %1292 = vmatprep.subr.mxu0 0.0
    %1293 = vmatpush1.msra.mxu0 0.0
    %1294 = vmatprep.subr.mxu0 0.0
    %1295 = vmatpush1.msra.mxu0 0.0
    %1296 = vmatprep.subr.mxu0 0.0
    %1297 = vmatpush1.msra.mxu0 0.0
    %1298 = vmatprep.subr.mxu0 0.0
    %1299 = vmatpush1.msra.mxu0 0.0
    %1300 = vmatprep.subr.mxu0 0.0
    %1301 = vmatpush1.msra.mxu0 %v331
    %1302 = vmatprep.subr.mxu0 0.0
    %1303 = vmatpush2.msra.mxu0 0.0
    %1304 = vmatprep.subr.mxu0 0.0
    %1305 = vmatpush2.msra.mxu0 0.0
    %1306 = vmatprep.subr.mxu0 0.0
    %1307 = vmatpush2.msra.mxu0 0.0
    %1308 = vmatprep.subr.mxu0 0.0
    %1309 = vmatpush2.msra.mxu0 0.0
    %1310 = vmatprep.subr.mxu0 0.0
    %1311 = vmatpush2.msra.mxu0 0.0
    %1312 = vmatprep.subr.mxu0 0.0
    %1313 = vmatpush2.msra.mxu0 0.0
    %1314 = vmatprep.subr.mxu0 0.0
    %1315 = vmatpush2.msra.mxu0 0.0
    %1316 = vmatprep.subr.mxu0 0.0
    %1317 = vmatpush2.msra.mxu0 0.0
    %1318 = vmatprep.subr.mxu0 0.0
    %1319 = vmatpush2.msra.mxu0 0.0
    %1320 = vmatprep.subr.mxu0 0.0
    %1321 = vmatpush2.msra.mxu0 0.0
    %1322 = vmatprep.subr.mxu0 0.0
    %1323 = vmatpush2.msra.mxu0 0.0
    %1324 = vmatprep.subr.mxu0 0.0
    %1325 = vmatpush2.msra.mxu0 0.0
    %1326 = vmatprep.subr.mxu0 0.0
    %1327 = vmatpush2.msra.mxu0 0.0
    %1328 = vmatprep.subr.mxu0 0.0
    %1329 = vmatpush2.msra.mxu0 0.0
    %1330 = vmatprep.subr.mxu0 0.0
    %1331 = vmatpush2.msra.mxu0 0.0
    %1332 = vmatprep.subr.mxu0 0.0
    %1333 = vmatpush2.msra.mxu0 0.0
    %1334 = vmatprep.mubr.f32.mxu0 0.0
    %1335 = vmatmul.mubr.f32.gmra.mxu0 %v1268
    %v1336 = vpop.f32.mrf.mxu0
    %v1337 = vadd.f32 0.0, %v1336
    %v1338 = vpop.f32.mrf.mxu0
    %1339 = vdwg.mxu0
    %v1341 = vsel %vm345, %v1041, 0
    %1343 = vmatprep.subr.mxu0 0.0
    %1344 = vmatpush1.msra.mxu0 0.0
    %1345 = vmatprep.subr.mxu0 0.0
    %1346 = vmatpush1.msra.mxu0 0.0
    %1347 = vmatprep.subr.mxu0 0.0
    %1348 = vmatpush1.msra.mxu0 0.0
    %1349 = vmatprep.subr.mxu0 0.0
    %1350 = vmatpush1.msra.mxu0 0.0
    %1351 = vmatprep.subr.mxu0 0.0
    %1352 = vmatpush1.msra.mxu0 0.0
    %1353 = vmatprep.subr.mxu0 0.0
    %1354 = vmatpush1.msra.mxu0 0.0
    %1355 = vmatprep.subr.mxu0 0.0
    %1356 = vmatpush1.msra.mxu0 0.0
    %1357 = vmatprep.subr.mxu0 0.0
    %1358 = vmatpush1.msra.mxu0 0.0
    %1359 = vmatprep.subr.mxu0 0.0
    %1360 = vmatpush1.msra.mxu0 0.0
    %1361 = vmatprep.subr.mxu0 0.0
    %1362 = vmatpush1.msra.mxu0 0.0
    %1363 = vmatprep.subr.mxu0 0.0
    %1364 = vmatpush1.msra.mxu0 0.0
    %1365 = vmatprep.subr.mxu0 0.0
    %1366 = vmatpush1.msra.mxu0 0.0
    %1367 = vmatprep.subr.mxu0 0.0
    %1368 = vmatpush1.msra.mxu0 0.0
    %1369 = vmatprep.subr.mxu0 0.0
    %1370 = vmatpush1.msra.mxu0 0.0
    %1371 = vmatprep.subr.mxu0 0.0
    %1372 = vmatpush1.msra.mxu0 0.0
    %1373 = vmatprep.subr.mxu0 0.0
    %1374 = vmatpush1.msra.mxu0 %v292
    %1375 = vmatprep.subr.mxu0 0.0
    %1376 = vmatpush2.msra.mxu0 0.0
    %1377 = vmatprep.subr.mxu0 0.0
    %1378 = vmatpush2.msra.mxu0 0.0
    %1379 = vmatprep.subr.mxu0 0.0
    %1380 = vmatpush2.msra.mxu0 0.0
    %1381 = vmatprep.subr.mxu0 0.0
    %1382 = vmatpush2.msra.mxu0 0.0
    %1383 = vmatprep.subr.mxu0 0.0
    %1384 = vmatpush2.msra.mxu0 0.0
    %1385 = vmatprep.subr.mxu0 0.0
    %1386 = vmatpush2.msra.mxu0 0.0
    %1387 = vmatprep.subr.mxu0 0.0
    %1388 = vmatpush2.msra.mxu0 0.0
    %1389 = vmatprep.subr.mxu0 0.0
    %1390 = vmatpush2.msra.mxu0 0.0
    %1391 = vmatprep.subr.mxu0 0.0
    %1392 = vmatpush2.msra.mxu0 0.0
    %1393 = vmatprep.subr.mxu0 0.0
    %1394 = vmatpush2.msra.mxu0 0.0
    %1395 = vmatprep.subr.mxu0 0.0
    %1396 = vmatpush2.msra.mxu0 0.0
    %1397 = vmatprep.subr.mxu0 0.0
    %1398 = vmatpush2.msra.mxu0 0.0
    %1399 = vmatprep.subr.mxu0 0.0
    %1400 = vmatpush2.msra.mxu0 0.0
    %1401 = vmatprep.subr.mxu0 0.0
    %1402 = vmatpush2.msra.mxu0 0.0
    %1403 = vmatprep.subr.mxu0 0.0
    %1404 = vmatpush2.msra.mxu0 0.0
    %1405 = vmatprep.subr.mxu0 0.0
    %1406 = vmatpush2.msra.mxu0 0.0
    %1407 = vmatprep.mubr.f32.mxu0 0.0
    %1408 = vmatmul.mubr.f32.gmra.mxu0 %v1341
    %v1409 = vpop.f32.mrf.mxu0
    %v1410 = vadd.f32 0.0, %v1409
    %v1411 = vpop.f32.mrf.mxu0
    %1412 = vdwg.mxu0
    %v1414 = vsel %vm345, %v1043, 0
    %1416 = vmatprep.subr.mxu0 0.0
    %1417 = vmatpush1.msra.mxu0 0.0
    %1418 = vmatprep.subr.mxu0 0.0
    %1419 = vmatpush1.msra.mxu0 0.0
    %1420 = vmatprep.subr.mxu0 0.0
    %1421 = vmatpush1.msra.mxu0 0.0
    %1422 = vmatprep.subr.mxu0 0.0
    %1423 = vmatpush1.msra.mxu0 0.0
    %1424 = vmatprep.subr.mxu0 0.0
    %1425 = vmatpush1.msra.mxu0 0.0
    %1426 = vmatprep.subr.mxu0 0.0
    %1427 = vmatpush1.msra.mxu0 0.0
    %1428 = vmatprep.subr.mxu0 0.0
    %1429 = vmatpush1.msra.mxu0 0.0
    %1430 = vmatprep.subr.mxu0 0.0
    %1431 = vmatpush1.msra.mxu0 0.0
    %1432 = vmatprep.subr.mxu0 0.0
    %1433 = vmatpush1.msra.mxu0 0.0
    %1434 = vmatprep.subr.mxu0 0.0
    %1435 = vmatpush1.msra.mxu0 0.0
    %1436 = vmatprep.subr.mxu0 0.0
    %1437 = vmatpush1.msra.mxu0 0.0
    %1438 = vmatprep.subr.mxu0 0.0
    %1439 = vmatpush1.msra.mxu0 0.0
    %1440 = vmatprep.subr.mxu0 0.0
    %1441 = vmatpush1.msra.mxu0 0.0
    %1442 = vmatprep.subr.mxu0 0.0
    %1443 = vmatpush1.msra.mxu0 0.0
    %1444 = vmatprep.subr.mxu0 0.0
    %1445 = vmatpush1.msra.mxu0 0.0
    %1446 = vmatprep.subr.mxu0 0.0
    %1447 = vmatpush1.msra.mxu0 %v335
    %1448 = vmatprep.subr.mxu0 0.0
    %1449 = vmatpush2.msra.mxu0 0.0
    %1450 = vmatprep.subr.mxu0 0.0
    %1451 = vmatpush2.msra.mxu0 0.0
    %1452 = vmatprep.subr.mxu0 0.0
    %1453 = vmatpush2.msra.mxu0 0.0
    %1454 = vmatprep.subr.mxu0 0.0
    %1455 = vmatpush2.msra.mxu0 0.0
    %1456 = vmatprep.subr.mxu0 0.0
    %1457 = vmatpush2.msra.mxu0 0.0
    %1458 = vmatprep.subr.mxu0 0.0
    %1459 = vmatpush2.msra.mxu0 0.0
    %1460 = vmatprep.subr.mxu0 0.0
    %1461 = vmatpush2.msra.mxu0 0.0
    %1462 = vmatprep.subr.mxu0 0.0
    %1463 = vmatpush2.msra.mxu0 0.0
    %1464 = vmatprep.subr.mxu0 0.0
    %1465 = vmatpush2.msra.mxu0 0.0
    %1466 = vmatprep.subr.mxu0 0.0
    %1467 = vmatpush2.msra.mxu0 0.0
    %1468 = vmatprep.subr.mxu0 0.0
    %1469 = vmatpush2.msra.mxu0 0.0
    %1470 = vmatprep.subr.mxu0 0.0
    %1471 = vmatpush2.msra.mxu0 0.0
    %1472 = vmatprep.subr.mxu0 0.0
    %1473 = vmatpush2.msra.mxu0 0.0
    %1474 = vmatprep.subr.mxu0 0.0
    %1475 = vmatpush2.msra.mxu0 0.0
    %1476 = vmatprep.subr.mxu0 0.0
    %1477 = vmatpush2.msra.mxu0 0.0
    %1478 = vmatprep.subr.mxu0 0.0
    %1479 = vmatpush2.msra.mxu0 0.0
    %1480 = vmatprep.mubr.f32.mxu0 0.0
    %1481 = vmatmul.mubr.f32.gmra.mxu0 %v1414
    %v1482 = vpop.f32.mrf.mxu0
    %v1483 = vadd.f32 0.0, %v1482
    %v1484 = vpop.f32.mrf.mxu0
    %1485 = vdwg.mxu0
    %v1487 = vsel %vm345, %v1045, 0
    %1489 = vmatprep.subr.mxu0 0.0
    %1490 = vmatpush1.msra.mxu0 0.0
    %1491 = vmatprep.subr.mxu0 0.0
    %1492 = vmatpush1.msra.mxu0 0.0
    %1493 = vmatprep.subr.mxu0 0.0
    %1494 = vmatpush1.msra.mxu0 0.0
    %1495 = vmatprep.subr.mxu0 0.0
    %1496 = vmatpush1.msra.mxu0 0.0
    %1497 = vmatprep.subr.mxu0 0.0
    %1498 = vmatpush1.msra.mxu0 0.0
    %1499 = vmatprep.subr.mxu0 0.0
    %1500 = vmatpush1.msra.mxu0 0.0
    %1501 = vmatprep.subr.mxu0 0.0
    %1502 = vmatpush1.msra.mxu0 0.0
    %1503 = vmatprep.subr.mxu0 0.0
    %1504 = vmatpush1.msra.mxu0 0.0
    %1505 = vmatprep.subr.mxu0 0.0
    %1506 = vmatpush1.msra.mxu0 0.0
    %1507 = vmatprep.subr.mxu0 0.0
    %1508 = vmatpush1.msra.mxu0 0.0
    %1509 = vmatprep.subr.mxu0 0.0
    %1510 = vmatpush1.msra.mxu0 0.0
    %1511 = vmatprep.subr.mxu0 0.0
    %1512 = vmatpush1.msra.mxu0 0.0
    %1513 = vmatprep.subr.mxu0 0.0
    %1514 = vmatpush1.msra.mxu0 0.0
    %1515 = vmatprep.subr.mxu0 0.0
    %1516 = vmatpush1.msra.mxu0 0.0
    %1517 = vmatprep.subr.mxu0 0.0
    %1518 = vmatpush1.msra.mxu0 0.0
    %1519 = vmatprep.subr.mxu0 0.0
    %1520 = vmatpush1.msra.mxu0 %v338
    %1521 = vmatprep.subr.mxu0 0.0
    %1522 = vmatpush2.msra.mxu0 0.0
    %1523 = vmatprep.subr.mxu0 0.0
    %1524 = vmatpush2.msra.mxu0 0.0
    %1525 = vmatprep.subr.mxu0 0.0
    %1526 = vmatpush2.msra.mxu0 0.0
    %1527 = vmatprep.subr.mxu0 0.0
    %1528 = vmatpush2.msra.mxu0 0.0
    %1529 = vmatprep.subr.mxu0 0.0
    %1530 = vmatpush2.msra.mxu0 0.0
    %1531 = vmatprep.subr.mxu0 0.0
    %1532 = vmatpush2.msra.mxu0 0.0
    %1533 = vmatprep.subr.mxu0 0.0
    %1534 = vmatpush2.msra.mxu0 0.0
    %1535 = vmatprep.subr.mxu0 0.0
    %1536 = vmatpush2.msra.mxu0 0.0
    %1537 = vmatprep.subr.mxu0 0.0
    %1538 = vmatpush2.msra.mxu0 0.0
    %1539 = vmatprep.subr.mxu0 0.0
    %1540 = vmatpush2.msra.mxu0 0.0
    %1541 = vmatprep.subr.mxu0 0.0
    %1542 = vmatpush2.msra.mxu0 0.0
    %1543 = vmatprep.subr.mxu0 0.0
    %1544 = vmatpush2.msra.mxu0 0.0
    %1545 = vmatprep.subr.mxu0 0.0
    %1546 = vmatpush2.msra.mxu0 0.0
    %1547 = vmatprep.subr.mxu0 0.0
    %1548 = vmatpush2.msra.mxu0 0.0
    %1549 = vmatprep.subr.mxu0 0.0
    %1550 = vmatpush2.msra.mxu0 0.0
    %1551 = vmatprep.subr.mxu0 0.0
    %1552 = vmatpush2.msra.mxu0 0.0
    %1553 = vmatprep.mubr.f32.mxu0 0.0
    %1554 = vmatmul.mubr.f32.gmra.mxu0 %v1487
    %v1555 = vpop.f32.mrf.mxu0
    %v1556 = vadd.f32 0.0, %v1555
    %v1557 = vpop.f32.mrf.mxu0
    %1558 = vdwg.mxu0
    %v1560 = vsel %vm345, %v1047, 0
    %1562 = vmatprep.subr.mxu0 0.0
    %1563 = vmatpush1.msra.mxu0 0.0
    %1564 = vmatprep.subr.mxu0 0.0
    %1565 = vmatpush1.msra.mxu0 0.0
    %1566 = vmatprep.subr.mxu0 0.0
    %1567 = vmatpush1.msra.mxu0 0.0
    %1568 = vmatprep.subr.mxu0 0.0
    %1569 = vmatpush1.msra.mxu0 0.0
    %1570 = vmatprep.subr.mxu0 0.0
    %1571 = vmatpush1.msra.mxu0 0.0
    %1572 = vmatprep.subr.mxu0 0.0
    %1573 = vmatpush1.msra.mxu0 0.0
    %1574 = vmatprep.subr.mxu0 0.0
    %1575 = vmatpush1.msra.mxu0 0.0
    %1576 = vmatprep.subr.mxu0 0.0
    %1577 = vmatpush1.msra.mxu0 0.0
    %1578 = vmatprep.subr.mxu0 0.0
    %1579 = vmatpush1.msra.mxu0 0.0
    %1580 = vmatprep.subr.mxu0 0.0
    %1581 = vmatpush1.msra.mxu0 0.0
    %1582 = vmatprep.subr.mxu0 0.0
    %1583 = vmatpush1.msra.mxu0 0.0
    %1584 = vmatprep.subr.mxu0 0.0
    %1585 = vmatpush1.msra.mxu0 0.0
    %1586 = vmatprep.subr.mxu0 0.0
    %1587 = vmatpush1.msra.mxu0 0.0
    %1588 = vmatprep.subr.mxu0 0.0
    %1589 = vmatpush1.msra.mxu0 0.0
    %1590 = vmatprep.subr.mxu0 0.0
    %1591 = vmatpush1.msra.mxu0 0.0
    %1592 = vmatprep.subr.mxu0 0.0
    %1593 = vmatpush1.msra.mxu0 %v341
    %1594 = vmatprep.subr.mxu0 0.0
    %1595 = vmatpush2.msra.mxu0 0.0
    %1596 = vmatprep.subr.mxu0 0.0
    %1597 = vmatpush2.msra.mxu0 0.0
    %1598 = vmatprep.subr.mxu0 0.0
    %1599 = vmatpush2.msra.mxu0 0.0
    %1600 = vmatprep.subr.mxu0 0.0
    %1601 = vmatpush2.msra.mxu0 0.0
    %1602 = vmatprep.subr.mxu0 0.0
    %1603 = vmatpush2.msra.mxu0 0.0
    %1604 = vmatprep.subr.mxu0 0.0
    %1605 = vmatpush2.msra.mxu0 0.0
    %1606 = vmatprep.subr.mxu0 0.0
    %1607 = vmatpush2.msra.mxu0 0.0
    %1608 = vmatprep.subr.mxu0 0.0
    %1609 = vmatpush2.msra.mxu0 0.0
    %1610 = vmatprep.subr.mxu0 0.0
    %1611 = vmatpush2.msra.mxu0 0.0
    %1612 = vmatprep.subr.mxu0 0.0
    %1613 = vmatpush2.msra.mxu0 0.0
    %1614 = vmatprep.subr.mxu0 0.0
    %1615 = vmatpush2.msra.mxu0 0.0
    %1616 = vmatprep.subr.mxu0 0.0
    %1617 = vmatpush2.msra.mxu0 0.0
    %1618 = vmatprep.subr.mxu0 0.0
    %1619 = vmatpush2.msra.mxu0 0.0
    %1620 = vmatprep.subr.mxu0 0.0
    %1621 = vmatpush2.msra.mxu0 0.0
    %1622 = vmatprep.subr.mxu0 0.0
    %1623 = vmatpush2.msra.mxu0 0.0
    %1624 = vmatprep.subr.mxu0 0.0
    %1625 = vmatpush2.msra.mxu0 0.0
    %1626 = vmatprep.mubr.f32.mxu0 0.0
    %1627 = vmatmul.mubr.f32.gmra.mxu0 %v1560
    %v1628 = vpop.f32.mrf.mxu0
    %v1629 = vadd.f32 0.0, %v1628
    %v1630 = vpop.f32.mrf.mxu0
    %1631 = vdwg.mxu0
    %1633 = vrot.lane.b32.xlu0 %v1191, 8
    %v1634 = vpop.permute.xlu0 %1633
    %1637 = vrot.lane.b32.xlu0 %v1264, 16
    %v1638 = vpop.permute.xlu0 %1637
    %1641 = vrot.lane.b32.xlu0 %v1337, 24
    %v1642 = vpop.permute.xlu0 %1641
    %v1644 = vsel %vm345, %v1118, %v1634
    %vm1645 = vcmask 130048
    %v1646 = vsel %vm1645, %v1644, %v1638
    %vm1647 = vcmask 195584
    %v1648 = vsel %vm1647, %v1646, %v1642
    %1650 = vrot.lane.b32.xlu0 %v1483, 8
    %v1651 = vpop.permute.xlu0 %1650
    %1654 = vrot.lane.b32.xlu0 %v1556, 16
    %v1655 = vpop.permute.xlu0 %1654
    %1658 = vrot.lane.b32.xlu0 %v1629, 24
    %v1659 = vpop.permute.xlu0 %1658
    %v1661 = vsel %vm345, %v1410, %v1651
    %v1662 = vsel %vm1645, %v1661, %v1655
    %v1663 = vsel %vm1647, %v1662, %v1659
    %v1664 = vlaneseq
    %v1665 = vshrl.u32 %v1664, 7
    %v1666 = vsub.s32 0, %v1665
    %v1667 = vrot.slane %v117, %v1666
    %v1669 = vsel %vm128, %v1648, 0
    %v1672 = vsel %vm128, %v1663, 0
    %1674 = vmatprep.subr.mxu0 0.0
    %1675 = vmatpush1.msra.mxu0 0.0
    %1676 = vmatprep.subr.mxu0 0.0
    %1677 = vmatpush1.msra.mxu0 0.0
    %1678 = vmatprep.subr.mxu0 0.0
    %1679 = vmatpush1.msra.mxu0 0.0
    %1680 = vmatprep.subr.mxu0 0.0
    %1681 = vmatpush1.msra.mxu0 0.0
    %1682 = vmatprep.subr.mxu0 0.0
    %1683 = vmatpush1.msra.mxu0 0.0
    %1684 = vmatprep.subr.mxu0 0.0
    %1685 = vmatpush1.msra.mxu0 0.0
    %1686 = vmatprep.subr.mxu0 0.0
    %1687 = vmatpush1.msra.mxu0 0.0
    %1688 = vmatprep.subr.mxu0 0.0
    %1689 = vmatpush1.msra.mxu0 0.0
    %1690 = vmatprep.subr.mxu0 0.0
    %1691 = vmatpush1.msra.mxu0 0.0
    %1692 = vmatprep.subr.mxu0 0.0
    %1693 = vmatpush1.msra.mxu0 0.0
    %1694 = vmatprep.subr.mxu0 0.0
    %1695 = vmatpush1.msra.mxu0 0.0
    %1696 = vmatprep.subr.mxu0 0.0
    %1697 = vmatpush1.msra.mxu0 0.0
    %1698 = vmatprep.subr.mxu0 0.0
    %1699 = vmatpush1.msra.mxu0 %v102
    %1700 = vmatprep.subr.mxu0 0.0
    %1701 = vmatpush1.msra.mxu0 %v101
    %1702 = vmatprep.subr.mxu0 0.0
    %1703 = vmatpush1.msra.mxu0 %v100
    %1704 = vmatprep.subr.mxu0 0.0
    %1705 = vmatpush1.msra.mxu0 %v99
    %1706 = vmatprep.subr.mxu0 0.0
    %1707 = vmatpush2.msra.mxu0 0.0
    %1708 = vmatprep.subr.mxu0 0.0
    %1709 = vmatpush2.msra.mxu0 0.0
    %1710 = vmatprep.subr.mxu0 0.0
    %1711 = vmatpush2.msra.mxu0 0.0
    %1712 = vmatprep.subr.mxu0 0.0
    %1713 = vmatpush2.msra.mxu0 0.0
    %1714 = vmatprep.subr.mxu0 0.0
    %1715 = vmatpush2.msra.mxu0 0.0
    %1716 = vmatprep.subr.mxu0 0.0
    %1717 = vmatpush2.msra.mxu0 0.0
    %1718 = vmatprep.subr.mxu0 0.0
    %1719 = vmatpush2.msra.mxu0 0.0
    %1720 = vmatprep.subr.mxu0 0.0
    %1721 = vmatpush2.msra.mxu0 0.0
    %1722 = vmatprep.subr.mxu0 0.0
    %1723 = vmatpush2.msra.mxu0 0.0
    %1724 = vmatprep.subr.mxu0 0.0
    %1725 = vmatpush2.msra.mxu0 0.0
    %1726 = vmatprep.subr.mxu0 0.0
    %1727 = vmatpush2.msra.mxu0 0.0
    %1728 = vmatprep.subr.mxu0 0.0
    %1729 = vmatpush2.msra.mxu0 0.0
    %1730 = vmatprep.subr.mxu0 0.0
    %1731 = vmatpush2.msra.mxu0 0.0
    %1732 = vmatprep.subr.mxu0 0.0
    %1733 = vmatpush2.msra.mxu0 0.0
    %1734 = vmatprep.subr.mxu0 0.0
    %1735 = vmatpush2.msra.mxu0 0.0
    %1736 = vmatprep.subr.mxu0 0.0
    %1737 = vmatpush2.msra.mxu0 0.0
    %1738 = vmatprep.mubr.f32.mxu0 0.0
    %1739 = vmatmul.mubr.f32.gmra.mxu0 %v1669
    %v1740 = vpop.f32.mrf.mxu0
    %v1741 = vadd.f32 %v1667, %v1740
    %v1742 = vpop.f32.mrf.mxu0
    %1743 = vmatprep.mubr.f32.mxu0 0.0
    %1744 = vmatmul.mubr.f32.gmra.mxu0 %v1672
    %v1745 = vpop.f32.mrf.mxu0
    %v1746 = vadd.f32 %v1667, %v1745
    %v1747 = vpop.f32.mrf.mxu0
    %1748 = vdwg.mxu0
    %v1749 = vadd.f32 %v85, %v1741
    %v1750 = vadd.f32 %v86, %v1746
    %v1751 = vsel %vm128, %v1749, 0.0
    %1752 = vadd.xlane.f32.xlu0 %v1751
    %v1753 = vpop.xlane.xlu0 %1752
    %v1754 = vsel %vm128, %v1750, 0.0
    %1755 = vadd.xlane.f32.xlu0 %v1754
    %v1756 = vpop.xlane.xlu0 %1755
    %v1757 = vrcp.pop 32.0
    %v1758 = vmul.f32 %v1753, %v1757
    %v1759 = vmul.f32 %v1756, %v1757
    %v1760 = vsub.f32 %v1749, %v1758
    %v1761 = vsub.f32 %v1750, %v1759
    %v1762 = vmul.f32 %v1760, %v1760
    %v1763 = vmul.f32 %v1761, %v1761
    %v1764 = vsel %vm128, %v1762, 0.0
    %1765 = vadd.xlane.f32.xlu0 %v1764
    %v1766 = vpop.xlane.xlu0 %1765
    %v1767 = vsel %vm128, %v1763, 0.0
    %1768 = vadd.xlane.f32.xlu0 %v1767
    %v1769 = vpop.xlane.xlu0 %1768
    %v1770 = vmul.f32 %v1766, %v1757
    %v1771 = vmul.f32 %v1769, %v1757
    %v1772 = vadd.f32 %v1770, 1e-05
    %v1773 = vadd.f32 %v1771, 1e-05
    %v1774 = vrsqrt.pop %v1772
    %v1775 = vrsqrt.pop %v1773
    %v1776 = vmul.f32 %v1760, %v1774
    %v1777 = vmul.f32 %v1761, %v1775
    %v1778 = vlaneseq
    %v1779 = vshrl.u32 %v1778, 7
    %v1780 = vsub.s32 0, %v1779
    %v1781 = vrot.slane %v120, %v1780
    %v1782 = vmul.f32 %v1776, %v1781
    %v1783 = vmul.f32 %v1777, %v1781
    %v1784 = vlaneseq
    %v1785 = vshrl.u32 %v1784, 7
    %v1786 = vsub.s32 0, %v1785
    %v1787 = vrot.slane %v121, %v1786
    %v1788 = vadd.f32 %v1782, %v1787
    %v1789 = vadd.f32 %v1783, %v1787
    %v1790 = vlaneseq
    %v1791 = vshrl.u32 %v1790, 7
    %v1792 = vsub.s32 0, %v1791
    %v1793 = vrot.slane %v118, %v1792
    %v1795 = vsel %vm128, %v1788, 0
    %v1798 = vsel %vm128, %v1789, 0
    %1800 = vmatprep.subr.mxu0 0.0
    %1801 = vmatpush1.msra.mxu0 0.0
    %1802 = vmatprep.subr.mxu0 0.0
    %1803 = vmatpush1.msra.mxu0 0.0
    %1804 = vmatprep.subr.mxu0 0.0
    %1805 = vmatpush1.msra.mxu0 0.0
    %1806 = vmatprep.subr.mxu0 0.0
    %1807 = vmatpush1.msra.mxu0 0.0
    %1808 = vmatprep.subr.mxu0 0.0
    %1809 = vmatpush1.msra.mxu0 0.0
    %1810 = vmatprep.subr.mxu0 0.0
    %1811 = vmatpush1.msra.mxu0 0.0
    %1812 = vmatprep.subr.mxu0 0.0
    %1813 = vmatpush1.msra.mxu0 0.0
    %1814 = vmatprep.subr.mxu0 0.0
    %1815 = vmatpush1.msra.mxu0 0.0
    %1816 = vmatprep.subr.mxu0 0.0
    %1817 = vmatpush1.msra.mxu0 0.0
    %1818 = vmatprep.subr.mxu0 0.0
    %1819 = vmatpush1.msra.mxu0 0.0
    %1820 = vmatprep.subr.mxu0 0.0
    %1821 = vmatpush1.msra.mxu0 0.0
    %1822 = vmatprep.subr.mxu0 0.0
    %1823 = vmatpush1.msra.mxu0 0.0
    %1824 = vmatprep.subr.mxu0 0.0
    %1825 = vmatpush1.msra.mxu0 %v106
    %1826 = vmatprep.subr.mxu0 0.0
    %1827 = vmatpush1.msra.mxu0 %v105
    %1828 = vmatprep.subr.mxu0 0.0
    %1829 = vmatpush1.msra.mxu0 %v104
    %1830 = vmatprep.subr.mxu0 0.0
    %1831 = vmatpush1.msra.mxu0 %v103
    %1832 = vmatprep.subr.mxu0 0.0
    %1833 = vmatpush2.msra.mxu0 0.0
    %1834 = vmatprep.subr.mxu0 0.0
    %1835 = vmatpush2.msra.mxu0 0.0
    %1836 = vmatprep.subr.mxu0 0.0
    %1837 = vmatpush2.msra.mxu0 0.0
    %1838 = vmatprep.subr.mxu0 0.0
    %1839 = vmatpush2.msra.mxu0 0.0
    %1840 = vmatprep.subr.mxu0 0.0
    %1841 = vmatpush2.msra.mxu0 0.0
    %1842 = vmatprep.subr.mxu0 0.0
    %1843 = vmatpush2.msra.mxu0 0.0
    %1844 = vmatprep.subr.mxu0 0.0
    %1845 = vmatpush2.msra.mxu0 0.0
    %1846 = vmatprep.subr.mxu0 0.0
    %1847 = vmatpush2.msra.mxu0 0.0
    %1848 = vmatprep.subr.mxu0 0.0
    %1849 = vmatpush2.msra.mxu0 0.0
    %1850 = vmatprep.subr.mxu0 0.0
    %1851 = vmatpush2.msra.mxu0 0.0
    %1852 = vmatprep.subr.mxu0 0.0
    %1853 = vmatpush2.msra.mxu0 0.0
    %1854 = vmatprep.subr.mxu0 0.0
    %1855 = vmatpush2.msra.mxu0 0.0
    %1856 = vmatprep.subr.mxu0 0.0
    %1857 = vmatpush2.msra.mxu0 0.0
    %1858 = vmatprep.subr.mxu0 0.0
    %1859 = vmatpush2.msra.mxu0 0.0
    %1860 = vmatprep.subr.mxu0 0.0
    %1861 = vmatpush2.msra.mxu0 0.0
    %1862 = vmatprep.subr.mxu0 0.0
    %1863 = vmatpush2.msra.mxu0 0.0
    %1864 = vmatprep.mubr.f32.mxu0 0.0
    %1865 = vmatmul.mubr.f32.gmra.mxu0 %v1795
    %v1866 = vpop.f32.mrf.mxu0
    %v1867 = vadd.f32 %v1793, %v1866
    %v1868 = vpop.f32.mrf.mxu0
    %1869 = vmatprep.mubr.f32.mxu0 0.0
    %1870 = vmatmul.mubr.f32.gmra.mxu0 %v1798
    %v1871 = vpop.f32.mrf.mxu0
    %v1872 = vadd.f32 %v1793, %v1871
    %v1873 = vpop.f32.mrf.mxu0
    %1874 = vdwg.mxu0
    %v1875 = vmax.f32 %v1867, 0.0
    %v1876 = vmax.f32 %v1872, 0.0
    %v1877 = vlaneseq
    %v1878 = vshrl.u32 %v1877, 7
    %v1879 = vsub.s32 0, %v1878
    %v1880 = vrot.slane %v119, %v1879
    %vm1881 = vcmask 523264
    %v1883 = vsel %vm1881, %v1875, 0
    %v1886 = vsel %vm1881, %v1876, 0
    %1888 = vmatprep.subr.mxu0 0.0
    %1889 = vmatpush1.msra.mxu0 0.0
    %1890 = vmatprep.subr.mxu0 0.0
    %1891 = vmatpush1.msra.mxu0 0.0
    %1892 = vmatprep.subr.mxu0 0.0
    %1893 = vmatpush1.msra.mxu0 0.0
    %1894 = vmatprep.subr.mxu0 0.0
    %1895 = vmatpush1.msra.mxu0 0.0
    %1896 = vmatprep.subr.mxu0 0.0
    %1897 = vmatpush1.msra.mxu0 0.0
    %1898 = vmatprep.subr.mxu0 0.0
    %1899 = vmatpush1.msra.mxu0 0.0
    %1900 = vmatprep.subr.mxu0 0.0
    %1901 = vmatpush1.msra.mxu0 0.0
    %1902 = vmatprep.subr.mxu0 0.0
    %1903 = vmatpush1.msra.mxu0 0.0
    %1904 = vmatprep.subr.mxu0 0.0
    %1905 = vmatpush1.msra.mxu0 %v114
    %1906 = vmatprep.subr.mxu0 0.0
    %1907 = vmatpush1.msra.mxu0 %v113
    %1908 = vmatprep.subr.mxu0 0.0
    %1909 = vmatpush1.msra.mxu0 %v112
    %1910 = vmatprep.subr.mxu0 0.0
    %1911 = vmatpush1.msra.mxu0 %v111
    %1912 = vmatprep.subr.mxu0 0.0
    %1913 = vmatpush1.msra.mxu0 %v110
    %1914 = vmatprep.subr.mxu0 0.0
    %1915 = vmatpush1.msra.mxu0 %v109
    %1916 = vmatprep.subr.mxu0 0.0
    %1917 = vmatpush1.msra.mxu0 %v108
    %1918 = vmatprep.subr.mxu0 0.0
    %1919 = vmatpush1.msra.mxu0 %v107
    %1920 = vmatprep.subr.mxu0 0.0
    %1921 = vmatpush2.msra.mxu0 0.0
    %1922 = vmatprep.subr.mxu0 0.0
    %1923 = vmatpush2.msra.mxu0 0.0
    %1924 = vmatprep.subr.mxu0 0.0
    %1925 = vmatpush2.msra.mxu0 0.0
    %1926 = vmatprep.subr.mxu0 0.0
    %1927 = vmatpush2.msra.mxu0 0.0
    %1928 = vmatprep.subr.mxu0 0.0
    %1929 = vmatpush2.msra.mxu0 0.0
    %1930 = vmatprep.subr.mxu0 0.0
    %1931 = vmatpush2.msra.mxu0 0.0
    %1932 = vmatprep.subr.mxu0 0.0
    %1933 = vmatpush2.msra.mxu0 0.0
    %1934 = vmatprep.subr.mxu0 0.0
    %1935 = vmatpush2.msra.mxu0 0.0
    %1936 = vmatprep.subr.mxu0 0.0
    %1937 = vmatpush2.msra.mxu0 0.0
    %1938 = vmatprep.subr.mxu0 0.0
    %1939 = vmatpush2.msra.mxu0 0.0
    %1940 = vmatprep.subr.mxu0 0.0
    %1941 = vmatpush2.msra.mxu0 0.0
    %1942 = vmatprep.subr.mxu0 0.0
    %1943 = vmatpush2.msra.mxu0 0.0
    %1944 = vmatprep.subr.mxu0 0.0
    %1945 = vmatpush2.msra.mxu0 0.0
    %1946 = vmatprep.subr.mxu0 0.0
    %1947 = vmatpush2.msra.mxu0 0.0
    %1948 = vmatprep.subr.mxu0 0.0
    %1949 = vmatpush2.msra.mxu0 0.0
    %1950 = vmatprep.subr.mxu0 0.0
    %1951 = vmatpush2.msra.mxu0 0.0
    %1952 = vmatprep.mubr.f32.mxu0 0.0
    %1953 = vmatmul.mubr.f32.gmra.mxu0 %v1883
    %v1954 = vpop.f32.mrf.mxu0
    %v1955 = vadd.f32 %v1880, %v1954
    %v1956 = vpop.f32.mrf.mxu0
    %1957 = vmatprep.mubr.f32.mxu0 0.0
    %1958 = vmatmul.mubr.f32.gmra.mxu0 %v1886
    %v1959 = vpop.f32.mrf.mxu0
    %v1960 = vadd.f32 %v1880, %v1959
    %v1961 = vpop.f32.mrf.mxu0
    %1962 = vdwg.mxu0
    %v1963 = vadd.f32 %v1788, %v1955
    %v1964 = vadd.f32 %v1789, %v1960
    %v1965 = vsel %vm128, %v1963, 0.0
    %1966 = vadd.xlane.f32.xlu0 %v1965
    %v1967 = vpop.xlane.xlu0 %1966
    %v1968 = vsel %vm128, %v1964, 0.0
    %1969 = vadd.xlane.f32.xlu0 %v1968
    %v1970 = vpop.xlane.xlu0 %1969
    %v1971 = vmul.f32 %v1967, %v1757
    %v1972 = vmul.f32 %v1970, %v1757
    %v1973 = vsub.f32 %v1963, %v1971
    %v1974 = vsub.f32 %v1964, %v1972
    %v1975 = vmul.f32 %v1973, %v1973
    %v1976 = vmul.f32 %v1974, %v1974
    %v1977 = vsel %vm128, %v1975, 0.0
    %1978 = vadd.xlane.f32.xlu0 %v1977
    %v1979 = vpop.xlane.xlu0 %1978
    %v1980 = vsel %vm128, %v1976, 0.0
    %1981 = vadd.xlane.f32.xlu0 %v1980
    %v1982 = vpop.xlane.xlu0 %1981
    %v1983 = vmul.f32 %v1979, %v1757
    %v1984 = vmul.f32 %v1982, %v1757
    %v1985 = vadd.f32 %v1983, 1e-05
    %v1986 = vadd.f32 %v1984, 1e-05
    %v1987 = vrsqrt.pop %v1985
    %v1988 = vrsqrt.pop %v1986
    %v1989 = vmul.f32 %v1973, %v1987
    %v1990 = vmul.f32 %v1974, %v1988
    %v1991 = vlaneseq
    %v1992 = vshrl.u32 %v1991, 7
    %v1993 = vsub.s32 0, %v1992
    %v1994 = vrot.slane %v122, %v1993
    %v1995 = vmul.f32 %v1989, %v1994
    %v1996 = vmul.f32 %v1990, %v1994
    %v1997 = vlaneseq
    %v1998 = vshrl.u32 %v1997, 7
    %v1999 = vsub.s32 0, %v1998
    %v2000 = vrot.slane %v123, %v1999
    %v2001 = vadd.f32 %v1995, %v2000
    %v2002 = vadd.f32 %v1996, %v2000
    %2003 = vst.msk [vmem:[#allocation10] sm:$0xff] %vm128, %v2001
    %2004 = vst.msk [vmem:[#allocation10 + $0x8] sm:$0xff] %vm128, %v2002
    // Predicated region
    $region50: #{tpu_custom_call.1} parent=1 // pred_check
      _
    $region51: #{tpu_custom_call.1} parent=1 // pred_check_branch
      %2006 = sbr.rel (0) target = $region53
    $region52: #{tpu_custom_call.1} parent=1 // pred_region
      %s2008 = ssub.s32 256, 256
      %2009 = vsyncadd [#allocation4], %s2008
      %s2010 = sshll.u32 [#allocation10], 4
      %s2011 = int_to_ptr.vmem [resolvable:$true] %s2010
      %2016 = dma.vmem_to_hbm [thread:$0]  %s2011, 256, %s8, [#allocation4], 128, 128, 8
    $region53: #{tpu_custom_call.1} parent=1 // pred_fallthru
      _
    // Predicated region
    $region54: #{tpu_custom_call.1} parent=1 // pred_check
      _
    $region55: #{tpu_custom_call.1} parent=1 // pred_check_branch
      %2018 = sbr.rel (0) target = $region57
    $region56: #{tpu_custom_call.1} parent=1 // pred_region
      %2019 = dma.done [#allocation4], 256
    $region57: #{tpu_custom_call.1} parent=1 // pred_fallthru
      _
    %2020 = vsyncpa [#allocation3], 1
    %2021 = vsyncpa [#allocation6], 1
    %2022 = vsyncpa [#allocation9], 1
    %2023 = vsyncpa [#allocation4], 1

</llo_original>
